<compile_context>
chip_gen: v7x
topology: tpu7x:2x2x1
jax: 0.10.0
libtpu: 0.0.40
codegen_flags: <defaults>
</compile_context>

<pallas_src>
import functools

import jax
import jax.numpy as jnp
from jax.experimental import pallas as pl
from jax.experimental.pallas import tpu as pltpu

_NEG_CLAMP = -100.0   # torch.nn.BCELoss clamps log terms at -100 (reference only)
_NUM_CORES = 2        # leading parallel grid axis (helps v7x megacore; no-op elsewhere)


def _make_kernel(*, total_pixels: int, inv_count: float, eps: float,
                 neg_slope: float, n_inner: int, pt: int):
    def kernel(d0_ref, d1_ref, j_ref, w1_ref, b1_ref, w2_ref, b2_ref,
               w3_ref, b3_ref, out_ref, feat_ref, acc_ref):
        c = pl.program_id(0)
        t = pl.program_id(1)

        @pl.when(t == 0)
        def _():
            acc_ref[...] = jnp.zeros_like(acc_ref)
            feat_ref[...] = jnp.zeros_like(feat_ref)   # rows 4..7 stay zero

        d0 = d0_ref[...]            # (1, pt)
        d1 = d1_ref[...]
        judge = j_ref[...]
        per = (judge + 1.0) * 0.5

        # Ratio features via EUP reciprocal (frees VALU slots).
        r01 = d0 * pl.reciprocal(d1 + eps, approx=False)
        r10 = d1 * pl.reciprocal(d0 + eps, approx=False)

        # Assemble the (8, pt) feature block: rows [d0, d1, r01, r10, 0,0,0,0].
        # The (d0 - d1) column was folded into the layer-1 weights host-side.
        feat_ref[0:1, :] = d0
        feat_ref[1:2, :] = d1
        feat_ref[2:3, :] = r01
        feat_ref[3:4, :] = r10

        # Layer 1: (chn x 8) @ (8 x pt) on the MXU.
        h = jnp.dot(w1_ref[...], feat_ref[...],
                    preferred_element_type=jnp.float32) + b1_ref[...]
        h = jnp.where(h >= 0, h, neg_slope * h)

        # Layer 2: (chn x chn) @ (chn x pt) on the MXU.
        h = jnp.dot(w2_ref[...], h,
                    preferred_element_type=jnp.float32) + b2_ref[...]
        h = jnp.where(h >= 0, h, neg_slope * h)

        # Layer 3: (8 x chn) @ (chn x pt) (w3 zero-padded to 8 rows), take row 0.
        z8 = jnp.dot(w3_ref[...], h, preferred_element_type=jnp.float32)
        z = z8[0:1, :] + b3_ref[...]                       # (1, pt) pre-sigmoid

        # Fused sigmoid + BCE, softplus form: softplus(z) - per * z.
        bce = jnp.maximum(z, 0.0) - per * z + jnp.log(1.0 + jnp.exp(-jnp.abs(z)))

        # In-kernel valid-pixel mask (inputs are zero-padded so the tail is finite).
        lane = jax.lax.broadcasted_iota(jnp.int32, (1, pt), 1)
        start = (c * n_inner + t) * pt
        valid = (lane + start) < total_pixels
        acc_ref[...] += jnp.where(valid, bce, 0.0)          # elementwise only

        @pl.when(t == pl.num_programs(1) - 1)
        def _():
            partial = jnp.sum(acc_ref[...], keepdims=True) * inv_count   # (1, 1)
            out_ref[...] = jnp.broadcast_to(partial, out_ref.shape)      # lane-dense

    return kernel


@functools.partial(jax.jit, static_argnames=("eps", "pixel_tile"))
def bce_ranking_loss(d0, d1, judge, w1, b1, w2, b2, w3, b3,
                     *, eps: float = 0.1, pixel_tile: int = 4096):
    """d0, d1, judge: (N, 1, H, W) float32. Weights are the Dist2LogitLayer
    1x1-conv parameters: w1 (chn,5), b1 (chn,), w2 (chn,chn), b2 (chn,),
    w3 (1,chn), b3 (1,). Returns scalar BCE ranking loss."""
    N, C, H, W = d0.shape
    assert C == 1, "Dist2LogitLayer expects single-channel distance maps"
    assert pixel_tile % 128 == 0
    chn = w1.shape[0]
    P = N * H * W

    # Shrink the tile for tiny inputs; keep it a multiple of 128.
    pt = max(128, min(pixel_tile, int(pl.next_power_of_2(P))))
    n_inner = pl.cdiv(pl.cdiv(P, pt), _NUM_CORES)
    P_pad = _NUM_CORES * n_inner * pt
    pad = P_pad - P

    f32 = jnp.float32

    def prep(x):
        return jnp.pad(x.reshape(1, P).astype(f32), ((0, 0), (0, pad)))

    d0f, d1f, jf = prep(d0), prep(d1), prep(judge)

    # Fold the (d0 - d1) feature column into the layer-1 weights, pad to 8 cols.
    w1 = w1.astype(f32)
    w1f = jnp.stack([w1[:, 0] + w1[:, 2],
                     w1[:, 1] - w1[:, 2],
                     w1[:, 3],
                     w1[:, 4]], axis=1)                    # (chn, 4)
    w1k = jnp.pad(w1f, ((0, 0), (0, 4)))                   # (chn, 8)
    b1k = b1.reshape(chn, 1).astype(f32)
    w2k = w2.astype(f32)                                   # (chn, chn)
    b2k = b2.reshape(chn, 1).astype(f32)
    w3k = jnp.pad(w3.reshape(1, chn).astype(f32), ((0, 7), (0, 0)))  # (8, chn)
    b3k = b3.reshape(1, 1).astype(f32)

    kernel = _make_kernel(total_pixels=P, inv_count=1.0 / P, eps=float(eps),
                          neg_slope=0.2, n_inner=n_inner, pt=pt)

    out = pl.pallas_call(
        kernel,
        out_shape=jax.ShapeDtypeStruct((_NUM_CORES * 8, 128), f32),
        grid_spec=pltpu.PrefetchScalarGridSpec(
            num_scalar_prefetch=0,
            grid=(_NUM_CORES, n_inner),
            in_specs=[
                pl.BlockSpec((1, pt), lambda c, t: (0, c * n_inner + t)),   # d0
                pl.BlockSpec((1, pt), lambda c, t: (0, c * n_inner + t)),   # d1
                pl.BlockSpec((1, pt), lambda c, t: (0, c * n_inner + t)),   # judge
                pl.BlockSpec((chn, 8), lambda c, t: (0, 0)),                # w1 folded
                pl.BlockSpec((chn, 1), lambda c, t: (0, 0)),                # b1
                pl.BlockSpec((chn, chn), lambda c, t: (0, 0)),              # w2
                pl.BlockSpec((chn, 1), lambda c, t: (0, 0)),                # b2
                pl.BlockSpec((8, chn), lambda c, t: (0, 0)),                # w3 padded
                pl.BlockSpec((1, 1), lambda c, t: (0, 0)),                  # b3
            ],
            out_specs=pl.BlockSpec((8, 128), lambda c, t: (c, 0)),
            scratch_shapes=[
                pltpu.VMEM((8, pt), f32),    # feat block (rows 4..7 stay zero)
                pltpu.VMEM((1, pt), f32),    # per-lane BCE partial sums
            ],
        ),
        compiler_params=pltpu.CompilerParams(
            dimension_semantics=("parallel", "arbitrary"),
        ),
    )(d0f, d1f, jf, w1k, b1k, w2k, b2k, w3k, b3k)

    # Each core's (8,128) block is filled with its (already 1/P-scaled) partial.
    return jnp.sum(out[::8, 0])


def _reference(d0, d1, judge, w1, b1, w2, b2, w3, b3, eps=0.1):
    """Pure-JAX replica of the PyTorch module (clamped-log BCE as in torch)."""
    hp = jax.lax.Precision.HIGHEST
    per = (judge + 1.0) / 2.0
    feat = jnp.concatenate(
        [d0, d1, d0 - d1, d0 / (d1 + eps), d1 / (d0 + eps)], axis=1)  # (N,5,H,W)
    h = jnp.einsum("oc,nchw->nohw", w1, feat, precision=hp) + b1[None, :, None, None]
    h = jnp.where(h >= 0, h, 0.2 * h)
    h = jnp.einsum("oc,nchw->nohw", w2, h, precision=hp) + b2[None, :, None, None]
    h = jnp.where(h >= 0, h, 0.2 * h)
    z = jnp.einsum("oc,nchw->nohw", w3, h, precision=hp) + b3[None, :, None, None]
    logit = 1.0 / (1.0 + jnp.exp(-z))
    log_p = jnp.maximum(jnp.log(logit), _NEG_CLAMP)
    log_1mp = jnp.maximum(jnp.log(1.0 - logit), _NEG_CLAMP)
    bce = -(per * log_p + (1.0 - per) * log_1mp)
    return jnp.mean(bce)


if __name__ == "__main__":
    key = jax.random.PRNGKey(0)
    ks = jax.random.split(key, 9)

    N, H, W = 2, 16, 16
    chn_mid = 32

    # LPIPS distances are non-negative; judge (human preference) is in [-1, 1].
    d0 = jax.random.uniform(ks[0], (N, 1, H, W), jnp.float32, 0.0, 1.0)
    d1 = jax.random.uniform(ks[1], (N, 1, H, W), jnp.float32, 0.0, 1.0)
    judge = jax.random.uniform(ks[2], (N, 1, H, W), jnp.float32, -1.0, 1.0)

    # Dist2LogitLayer 1x1-conv parameters (deterministic stand-ins for the
    # PyTorch default init).
    w1 = jax.random.normal(ks[3], (chn_mid, 5), jnp.float32) * 0.4
    b1 = jax.random.normal(ks[4], (chn_mid,), jnp.float32) * 0.1
    w2 = jax.random.normal(ks[5], (chn_mid, chn_mid), jnp.float32) * (chn_mid ** -0.5)
    b2 = jax.random.normal(ks[6], (chn_mid,), jnp.float32) * 0.1
    w3 = jax.random.normal(ks[7], (1, chn_mid), jnp.float32) * (chn_mid ** -0.5)
    b3 = jax.random.normal(ks[8], (1,), jnp.float32) * 0.1

    loss = bce_ranking_loss(d0, d1, judge, w1, b1, w2, b2, w3, b3)
    loss = jax.block_until_ready(loss)

    ref = _reference(d0, d1, judge, w1, b1, w2, b2, w3, b3)

    assert loss.shape == () and loss.dtype == jnp.float32
    assert bool(jnp.isfinite(loss))
    assert jnp.allclose(loss, ref, rtol=1e-4, atol=1e-4), (loss, ref)

    print("KERNEL_OK")
</pallas_src>

<mosaic_0001>
module attributes {stable_mosaic.version = 11 : i64} {
  func.func @kernel(%arg0: i32, %arg1: i32, %arg2: memref<1x512xf32, #tpu.memory_space<vmem>>, %arg3: memref<1x512xf32, #tpu.memory_space<vmem>>, %arg4: memref<1x512xf32, #tpu.memory_space<vmem>>, %arg5: memref<32x8xf32, #tpu.memory_space<vmem>>, %arg6: memref<32x1xf32, #tpu.memory_space<vmem>>, %arg7: memref<32x32xf32, #tpu.memory_space<vmem>>, %arg8: memref<32x1xf32, #tpu.memory_space<vmem>>, %arg9: memref<8x32xf32, #tpu.memory_space<vmem>>, %arg10: memref<1x1xf32, #tpu.memory_space<vmem>>, %arg11: memref<8x128xf32, #tpu.memory_space<vmem>>, %arg12: memref<8x512xf32, #tpu.memory_space<vmem>>, %arg13: memref<1x512xf32, #tpu.memory_space<vmem>>) attributes {dimension_semantics = [#tpu.dimension_semantics<parallel>, #tpu.dimension_semantics<arbitrary>], iteration_bounds = array<i64: 2, 1>, scalar_prefetch = 0 : i64, scratch_operands = 2 : i64, tpu.core_type = #tpu.core_type<tc>, window_params = [{transform_indices = @transform_0, window_bounds = array<i64: 1, 512>}, {transform_indices = @transform_1, window_bounds = array<i64: 1, 512>}, {transform_indices = @transform_2, window_bounds = array<i64: 1, 512>}, {pipeline_mode = #tpu.pipeline_mode<synchronous>, transform_indices = @transform_3, window_bounds = array<i64: 32, 8>}, {pipeline_mode = #tpu.pipeline_mode<synchronous>, transform_indices = @transform_4, window_bounds = array<i64: 32, 1>}, {pipeline_mode = #tpu.pipeline_mode<synchronous>, transform_indices = @transform_5, window_bounds = array<i64: 32, 32>}, {pipeline_mode = #tpu.pipeline_mode<synchronous>, transform_indices = @transform_6, window_bounds = array<i64: 32, 1>}, {pipeline_mode = #tpu.pipeline_mode<synchronous>, transform_indices = @transform_7, window_bounds = array<i64: 8, 32>}, {pipeline_mode = #tpu.pipeline_mode<synchronous>, transform_indices = @transform_8, window_bounds = array<i64: 1, 1>}, {transform_indices = @transform_9, window_bounds = array<i64: 8, 128>}]} {
    %c0_i32 = arith.constant 0 : i32
    %0 = arith.cmpi eq, %arg1, %c0_i32 : i32
    %1 = arith.extui %0 : i1 to i32
    %c0_i32_0 = arith.constant 0 : i32
    %2 = arith.cmpi ne, %1, %c0_i32_0 : i32
    scf.if %2 {
      %cst_46 = arith.constant 0.000000e+00 : f32
      %77 = vector.broadcast %cst_46 : f32 to vector<1x512xf32>
      %c0_47 = arith.constant 0 : index
      %c0_48 = arith.constant 0 : index
      %78 = vector.load %arg13[%c0_47, %c0_48] : memref<1x512xf32, #tpu.memory_space<vmem>>, vector<1x512xf32>
      tpu.vector_store %arg13[%c0_47, %c0_48], %77 {strides = array<i32>} : memref<1x512xf32, #tpu.memory_space<vmem>>, vector<1x512xf32>,
      %cst_49 = arith.constant 0.000000e+00 : f32
      %79 = vector.broadcast %cst_49 : f32 to vector<8x512xf32>
      %c0_50 = arith.constant 0 : index
      %c0_51 = arith.constant 0 : index
      %80 = vector.load %arg12[%c0_50, %c0_51] : memref<8x512xf32, #tpu.memory_space<vmem>>, vector<8x512xf32>
      tpu.vector_store %arg12[%c0_50, %c0_51], %79 {strides = array<i32>} : memref<8x512xf32, #tpu.memory_space<vmem>>, vector<8x512xf32>,
    } else {
    }
    %c0 = arith.constant 0 : index
    %c0_1 = arith.constant 0 : index
    %3 = vector.load %arg2[%c0, %c0_1] : memref<1x512xf32, #tpu.memory_space<vmem>>, vector<1x512xf32>
    %c0_2 = arith.constant 0 : index
    %c0_3 = arith.constant 0 : index
    %4 = vector.load %arg3[%c0_2, %c0_3] : memref<1x512xf32, #tpu.memory_space<vmem>>, vector<1x512xf32>
    %c0_4 = arith.constant 0 : index
    %c0_5 = arith.constant 0 : index
    %5 = vector.load %arg4[%c0_4, %c0_5] : memref<1x512xf32, #tpu.memory_space<vmem>>, vector<1x512xf32>
    %cst = arith.constant 1.000000e+00 : f32
    %6 = vector.broadcast %cst : f32 to vector<1x512xf32>
    %7 = arith.addf %5, %6 : vector<1x512xf32>
    %cst_6 = arith.constant 5.000000e-01 : f32
    %8 = vector.broadcast %cst_6 : f32 to vector<1x512xf32>
    %9 = arith.mulf %7, %8 : vector<1x512xf32>
    %cst_7 = arith.constant 1.000000e-01 : f32
    %10 = vector.broadcast %cst_7 : f32 to vector<1x512xf32>
    %11 = arith.addf %4, %10 : vector<1x512xf32>
    %12 = tpu.reciprocal %11 : vector<1x512xf32> -> vector<1x512xf32>
    %13 = arith.mulf %3, %12 : vector<1x512xf32>
    %cst_8 = arith.constant 1.000000e-01 : f32
    %14 = vector.broadcast %cst_8 : f32 to vector<1x512xf32>
    %15 = arith.addf %3, %14 : vector<1x512xf32>
    %16 = tpu.reciprocal %15 : vector<1x512xf32> -> vector<1x512xf32>
    %17 = arith.mulf %4, %16 : vector<1x512xf32>
    %c0_9 = arith.constant 0 : index
    %c0_10 = arith.constant 0 : index
    %18 = vector.load %arg12[%c0_9, %c0_10] : memref<8x512xf32, #tpu.memory_space<vmem>>, vector<1x512xf32>
    tpu.vector_store %arg12[%c0_9, %c0_10], %3 {strides = array<i32>} : memref<8x512xf32, #tpu.memory_space<vmem>>, vector<1x512xf32>,
    %c1 = arith.constant 1 : index
    %c0_11 = arith.constant 0 : index
    %19 = vector.load %arg12[%c1, %c0_11] : memref<8x512xf32, #tpu.memory_space<vmem>>, vector<1x512xf32>
    tpu.vector_store %arg12[%c1, %c0_11], %4 {strides = array<i32>} : memref<8x512xf32, #tpu.memory_space<vmem>>, vector<1x512xf32>,
    %c2 = arith.constant 2 : index
    %c0_12 = arith.constant 0 : index
    %20 = vector.load %arg12[%c2, %c0_12] : memref<8x512xf32, #tpu.memory_space<vmem>>, vector<1x512xf32>
    tpu.vector_store %arg12[%c2, %c0_12], %13 {strides = array<i32>} : memref<8x512xf32, #tpu.memory_space<vmem>>, vector<1x512xf32>,
    %c3 = arith.constant 3 : index
    %c0_13 = arith.constant 0 : index
    %21 = vector.load %arg12[%c3, %c0_13] : memref<8x512xf32, #tpu.memory_space<vmem>>, vector<1x512xf32>
    tpu.vector_store %arg12[%c3, %c0_13], %17 {strides = array<i32>} : memref<8x512xf32, #tpu.memory_space<vmem>>, vector<1x512xf32>,
    %c0_14 = arith.constant 0 : index
    %c0_15 = arith.constant 0 : index
    %22 = vector.load %arg5[%c0_14, %c0_15] : memref<32x8xf32, #tpu.memory_space<vmem>>, vector<32x8xf32>
    %c0_16 = arith.constant 0 : index
    %c0_17 = arith.constant 0 : index
    %23 = vector.load %arg12[%c0_16, %c0_17] : memref<8x512xf32, #tpu.memory_space<vmem>>, vector<8x512xf32>
    %cst_18 = arith.constant dense<0.000000e+00> : vector<32x512xf32>
    %24 = tpu.matmul %22, %23, %cst_18 {dimension_numbers = #tpu.dot_dimension_numbers<[1], [0], [0], [1], [0, 0, 1, 1], [], []>} : vector<32x8xf32>, vector<8x512xf32>, vector<32x512xf32> -> vector<32x512xf32>
    %c0_19 = arith.constant 0 : index
    %c0_20 = arith.constant 0 : index
    %25 = vector.load %arg6[%c0_19, %c0_20] : memref<32x1xf32, #tpu.memory_space<vmem>>, vector<32x1xf32>
    %26 = vector.broadcast %25 : vector<32x1xf32> to vector<32x512xf32>
    %27 = arith.addf %24, %26 : vector<32x512xf32>
    %cst_21 = arith.constant 0.000000e+00 : f32
    %28 = vector.broadcast %cst_21 : f32 to vector<32x512xf32>
    %29 = arith.cmpf oge, %27, %28 : vector<32x512xf32>
    %cst_22 = arith.constant 2.000000e-01 : f32
    %30 = vector.broadcast %cst_22 : f32 to vector<32x512xf32>
    %31 = arith.mulf %30, %27 : vector<32x512xf32>
    %32 = arith.select %29, %27, %31 : vector<32x512xi1>, vector<32x512xf32>
    %c0_23 = arith.constant 0 : index
    %c0_24 = arith.constant 0 : index
    %33 = vector.load %arg7[%c0_23, %c0_24] : memref<32x32xf32, #tpu.memory_space<vmem>>, vector<32x32xf32>
    %cst_25 = arith.constant dense<0.000000e+00> : vector<32x512xf32>
    %34 = tpu.matmul %33, %32, %cst_25 {dimension_numbers = #tpu.dot_dimension_numbers<[1], [0], [0], [1], [0, 0, 1, 1], [], []>} : vector<32x32xf32>, vector<32x512xf32>, vector<32x512xf32> -> vector<32x512xf32>
    %c0_26 = arith.constant 0 : index
    %c0_27 = arith.constant 0 : index
    %35 = vector.load %arg8[%c0_26, %c0_27] : memref<32x1xf32, #tpu.memory_space<vmem>>, vector<32x1xf32>
    %36 = vector.broadcast %35 : vector<32x1xf32> to vector<32x512xf32>
    %37 = arith.addf %34, %36 : vector<32x512xf32>
    %cst_28 = arith.constant 0.000000e+00 : f32
    %38 = vector.broadcast %cst_28 : f32 to vector<32x512xf32>
    %39 = arith.cmpf oge, %37, %38 : vector<32x512xf32>
    %cst_29 = arith.constant 2.000000e-01 : f32
    %40 = vector.broadcast %cst_29 : f32 to vector<32x512xf32>
    %41 = arith.mulf %40, %37 : vector<32x512xf32>
    %42 = arith.select %39, %37, %41 : vector<32x512xi1>, vector<32x512xf32>
    %c0_30 = arith.constant 0 : index
    %c0_31 = arith.constant 0 : index
    %43 = vector.load %arg9[%c0_30, %c0_31] : memref<8x32xf32, #tpu.memory_space<vmem>>, vector<8x32xf32>
    %cst_32 = arith.constant dense<0.000000e+00> : vector<8x512xf32>
    %44 = tpu.matmul %43, %42, %cst_32 {dimension_numbers = #tpu.dot_dimension_numbers<[1], [0], [0], [1], [0, 0, 1, 1], [], []>} : vector<8x32xf32>, vector<32x512xf32>, vector<8x512xf32> -> vector<8x512xf32>
    %45 = vector.extract_strided_slice %44 {offsets = [0, 0], sizes = [1, 512], strides = [1, 1]} : vector<8x512xf32> to vector<1x512xf32>
    %c0_33 = arith.constant 0 : index
    %c0_34 = arith.constant 0 : index
    %46 = vector.load %arg10[%c0_33, %c0_34] : memref<1x1xf32, #tpu.memory_space<vmem>>, vector<1x1xf32>
    %47 = vector.broadcast %46 : vector<1x1xf32> to vector<1x512xf32>
    %48 = arith.addf %45, %47 : vector<1x512xf32>
    %cst_35 = arith.constant 0.000000e+00 : f32
    %49 = vector.broadcast %cst_35 : f32 to vector<1x512xf32>
    %50 = arith.maximumf %48, %49 : vector<1x512xf32>
    %51 = arith.mulf %9, %48 : vector<1x512xf32>
    %52 = arith.subf %50, %51 : vector<1x512xf32>
    %53 = math.absf %48 : vector<1x512xf32>
    %cst_36 = arith.constant 0.000000e+00 : f32
    %54 = vector.broadcast %cst_36 : f32 to vector<1x512xf32>
    %55 = arith.subf %54, %53 : vector<1x512xf32>
    %56 = math.exp %55 : vector<1x512xf32>
    %cst_37 = arith.constant 1.000000e+00 : f32
    %57 = vector.broadcast %cst_37 : f32 to vector<1x512xf32>
    %58 = arith.addf %57, %56 : vector<1x512xf32>
    %59 = math.log %58 : vector<1x512xf32>
    %60 = arith.addf %52, %59 : vector<1x512xf32>
    %61 = tpu.iota {dimensions = array<i32: 1>} : vector<1x512xi32>
    %c1_i32 = arith.constant 1 : i32
    %62 = arith.muli %arg0, %c1_i32 : i32
    %63 = arith.addi %62, %arg1 : i32
    %c512_i32 = arith.constant 512 : i32
    %64 = arith.muli %63, %c512_i32 : i32
    %65 = vector.broadcast %64 : i32 to vector<1x512xi32>
    %66 = arith.addi %61, %65 : vector<1x512xi32>
    %c512_i32_38 = arith.constant 512 : i32
    %67 = vector.broadcast %c512_i32_38 : i32 to vector<1x512xi32>
    %68 = arith.cmpi slt, %66, %67 : vector<1x512xi32>
    %c0_39 = arith.constant 0 : index
    %c0_40 = arith.constant 0 : index
    %69 = vector.load %arg13[%c0_39, %c0_40] : memref<1x512xf32, #tpu.memory_space<vmem>>, vector<1x512xf32>
    %cst_41 = arith.constant 0.000000e+00 : f32
    %70 = vector.broadcast %cst_41 : f32 to vector<1x512xf32>
    %71 = arith.select %68, %60, %70 : vector<1x512xi1>, vector<1x512xf32>
    %72 = arith.addf %69, %71 : vector<1x512xf32>
    %c0_42 = arith.constant 0 : index
    %c0_43 = arith.constant 0 : index
    %73 = vector.load %arg13[%c0_42, %c0_43] : memref<1x512xf32, #tpu.memory_space<vmem>>, vector<1x512xf32>
    tpu.vector_store %arg13[%c0_42, %c0_43], %72 {strides = array<i32>} : memref<1x512xf32, #tpu.memory_space<vmem>>, vector<1x512xf32>,
    %c0_i32_44 = arith.constant 0 : i32
    %74 = arith.cmpi eq, %arg1, %c0_i32_44 : i32
    %75 = arith.extui %74 : i1 to i32
    %c0_i32_45 = arith.constant 0 : i32
    %76 = arith.cmpi ne, %75, %c0_i32_45 : i32
    scf.if %76 {
      %c0_46 = arith.constant 0 : index
      %c0_47 = arith.constant 0 : index
      %77 = vector.load %arg13[%c0_46, %c0_47] : memref<1x512xf32, #tpu.memory_space<vmem>>, vector<1x512xf32>
      %78 = vector.shape_cast %77 : vector<1x512xf32> to vector<1x1x512xf32>
      %cst_48 = arith.constant dense<0.000000e+00> : vector<1xf32>
      %79 = vector.multi_reduction <add>, %78, %cst_48 [1, 2] : vector<1x1x512xf32> to vector<1xf32>
      %80 = vector.shape_cast %79 : vector<1xf32> to vector<1x1x1xf32>
      %81 = vector.extract %80[0, 0, 0] : f32 from vector<1x1x1xf32>
      %82 = vector.broadcast %81 : f32 to vector<1x1xf32>
      %cst_49 = arith.constant 0.001953125 : f32
      %83 = vector.broadcast %cst_49 : f32 to vector<1x1xf32>
      %84 = arith.mulf %82, %83 : vector<1x1xf32>
      %85 = vector.shape_cast %84 : vector<1x1xf32> to vector<1x1xf32>
      %86 = vector.broadcast %85 : vector<1x1xf32> to vector<8x128xf32>
      %c0_50 = arith.constant 0 : index
      %c0_51 = arith.constant 0 : index
      %87 = vector.load %arg11[%c0_50, %c0_51] : memref<8x128xf32, #tpu.memory_space<vmem>>, vector<8x128xf32>
      tpu.vector_store %arg11[%c0_50, %c0_51], %86 {strides = array<i32>} : memref<8x128xf32, #tpu.memory_space<vmem>>, vector<8x128xf32>,
    } else {
    }
    return
  }
  func.func @transform_0(%arg0: i32, %arg1: i32) -> (i32, i32) {
    %c1_i32 = arith.constant 1 : i32
    %0 = arith.muli %arg0, %c1_i32 : i32
    %1 = arith.addi %0, %arg1 : i32
    %c0_i32 = arith.constant 0 : i32
    %c0_i32_0 = arith.constant 0 : i32
    return %c0_i32, %1 : i32, i32
  }
  func.func @transform_1(%arg0: i32, %arg1: i32) -> (i32, i32) {
    %c1_i32 = arith.constant 1 : i32
    %0 = arith.muli %arg0, %c1_i32 : i32
    %1 = arith.addi %0, %arg1 : i32
    %c0_i32 = arith.constant 0 : i32
    %c0_i32_0 = arith.constant 0 : i32
    return %c0_i32, %1 : i32, i32
  }
  func.func @transform_2(%arg0: i32, %arg1: i32) -> (i32, i32) {
    %c1_i32 = arith.constant 1 : i32
    %0 = arith.muli %arg0, %c1_i32 : i32
    %1 = arith.addi %0, %arg1 : i32
    %c0_i32 = arith.constant 0 : i32
    %c0_i32_0 = arith.constant 0 : i32
    return %c0_i32, %1 : i32, i32
  }
  func.func @transform_3(%arg0: i32, %arg1: i32) -> (i32, i32) {
    %c0_i32 = arith.constant 0 : i32
    %c0_i32_0 = arith.constant 0 : i32
    %c0_i32_1 = arith.constant 0 : i32
    return %c0_i32, %c0_i32_0 : i32, i32
  }
  func.func @transform_4(%arg0: i32, %arg1: i32) -> (i32, i32) {
    %c0_i32 = arith.constant 0 : i32
    %c0_i32_0 = arith.constant 0 : i32
    %c0_i32_1 = arith.constant 0 : i32
    return %c0_i32, %c0_i32_0 : i32, i32
  }
  func.func @transform_5(%arg0: i32, %arg1: i32) -> (i32, i32) {
    %c0_i32 = arith.constant 0 : i32
    %c0_i32_0 = arith.constant 0 : i32
    %c0_i32_1 = arith.constant 0 : i32
    return %c0_i32, %c0_i32_0 : i32, i32
  }
  func.func @transform_6(%arg0: i32, %arg1: i32) -> (i32, i32) {
    %c0_i32 = arith.constant 0 : i32
    %c0_i32_0 = arith.constant 0 : i32
    %c0_i32_1 = arith.constant 0 : i32
    return %c0_i32, %c0_i32_0 : i32, i32
  }
  func.func @transform_7(%arg0: i32, %arg1: i32) -> (i32, i32) {
    %c0_i32 = arith.constant 0 : i32
    %c0_i32_0 = arith.constant 0 : i32
    %c0_i32_1 = arith.constant 0 : i32
    return %c0_i32, %c0_i32_0 : i32, i32
  }
  func.func @transform_8(%arg0: i32, %arg1: i32) -> (i32, i32) {
    %c0_i32 = arith.constant 0 : i32
    %c0_i32_0 = arith.constant 0 : i32
    %c0_i32_1 = arith.constant 0 : i32
    return %c0_i32, %c0_i32_0 : i32, i32
  }
  func.func @transform_9(%arg0: i32, %arg1: i32) -> (i32, i32) {
    %c0_i32 = arith.constant 0 : i32
    %c0_i32_0 = arith.constant 0 : i32
    return %arg0, %c0_i32 : i32, i32
  }
}

</mosaic_0001>

<llo_original>
// kernel: bce_ranking_loss.1
$region0: #{bce_ranking_loss.1}
  #allocation0 [shape = 'u32[]', space=smem, size = 0x4, offset = 0x4, fixed_abs, tag = 'smem constant byte address 0x4 - core index']
  #allocation1 [shape = 'u32[144,128]{1,0:T(1,128)}', space=vmem, size = 0x12000, scoped, tag = 'internal scratch']
  #allocation2 [shape = 'f32[8,512]{1,0:T(8,128)}', space=vmem, size = 0x4000, scoped, tag = 'scratch operand']
  #allocation3 [shape = 'f32[1,512]{1,0:T(1,128)}', space=vmem, size = 0x800, scoped, tag = 'scratch operand']
  #allocation4 [shape = 'f32[1,1]{1,0:T(1,128)S(1)}', space=vmem, size = 0x200, scoped, tag = 'scoped memory for bce_ranking_loss.1']
  %s0 = inlined_call_operand.vmem [shape: f32[1,1024], index: 0, kind: input, shape index: {}]
  %s1 = inlined_call_operand.vmem [shape: f32[1,1024], index: 1, kind: input, shape index: {}]
  %s2 = inlined_call_operand.vmem [shape: f32[1,1024], index: 2, kind: input, shape index: {}]
  %s3 = inlined_call_operand.vmem [shape: f32[32,8], index: 3, kind: input, shape index: {}]
  %s4 = inlined_call_operand.vmem [shape: f32[32,1], index: 4, kind: input, shape index: {}]
  %s5 = inlined_call_operand.vmem [shape: f32[32,32], index: 5, kind: input, shape index: {}]
  %s6 = inlined_call_operand.vmem [shape: f32[32,1], index: 6, kind: input, shape index: {}]
  %s7 = inlined_call_operand.vmem [shape: f32[8,32], index: 7, kind: input, shape index: {}]
  %s8 = inlined_call_operand.<no memory space> [shape: f32[1,1], index: 8, kind: input, shape index: {}]
  %s9 = inlined_call_operand.vmem [shape: f32[16,128], index: 9, kind: output, shape index: {}]
  %s10 = sld [smem:[#allocation0]]
  $region77: #{bce_ranking_loss.1} parent=0
    _
  %s12 = ssub.s32 1, %s10
  %s13 = scalar_select 0, %s12, %s10
  %v14 = vstv %s8
  %15 = vst [vmem:[#allocation4] sm:$0x1] %v14
  loop: start=0, step=1, limit=4
  $region2: #{bce_ranking_loss.1} parent=0 // loop_pre_header
    _
  $region3: #{bce_ranking_loss.1} parent=0 // loop_header
    %s17 = sphi 0, %s21
    %p18 = scmp.ge.s32.totalorder %s17, 4
    %s24 = sphi 0, %s36
    %s25 = sphi 0, %s32
    %s26 = sphi 0, %s24
    %s27 = sphi 0, %s25
    %s28 = sphi 0, %s26
    %s29 = sphi 0, %s27
    %s41 = sphi 0, %s43
    %s44 = sphi 0, %s41
    %s45 = sphi 0, %s44
    %s61 = sphi 0, %s45
    %s69 = sphi 0, %s71
    %s72 = sphi 0, %s69
    %s73 = sphi 0, %s72
    %s89 = sphi 0, %s73
    %s97 = sphi 0, %s99
    %s100 = sphi 0, %s97
    %s101 = sphi 0, %s100
    %s117 = sphi 0, %s101
    %s121 = sphi 0, %s121
    %s123 = sphi 0, %s121
    %s124 = sphi 0, %s123
    %s138 = sphi 0, %s124
    %s142 = sphi 0, %s142
    %s144 = sphi 0, %s142
    %s145 = sphi 0, %s144
    %s159 = sphi 0, %s145
    %s163 = sphi 0, %s163
    %s165 = sphi 0, %s163
    %s166 = sphi 0, %s165
    %s180 = sphi 0, %s166
    %s184 = sphi 0, %s184
    %s186 = sphi 0, %s184
    %s187 = sphi 0, %s186
    %s201 = sphi 0, %s187
    %s205 = sphi 0, %s205
    %s207 = sphi 0, %s205
    %s208 = sphi 0, %s207
    %s222 = sphi 0, %s208
    %s226 = sphi 0, %s226
    %s228 = sphi 0, %s226
    %s229 = sphi 0, %s228
    %s243 = sphi 0, %s229
    %s249 = sphi 0, %s251
    %s252 = sphi 0, %s249
    %s253 = sphi 0, %s252
    %s269 = sphi 0, %s253
  $region4: #{bce_ranking_loss.1} parent=0 // loop_header_branch
    %20 = sbr.rel (%p18) target = $region8
  $region5: #{bce_ranking_loss.1} parent=0 // loop_body
    %s22 = ssub.s32 %s17, 1
    %s23 = ssub.s32 %s17, 2
    %s30 = sadd.s32 1, %s25
    %p31 = scmp.ge.s32.totalorder %s30, 1
    %s32 = scalar_select %p31, 0, %s30
    %s33 = sadd.s32 1, %s24
    %s34 = scalar_select %p31, %s33, %s24
    %p35 = scmp.ge.s32.totalorder %s34, 2
    %s36 = scalar_select %p35, 0, %s34
    %s37 = sadd.s32 %s24, %s25
    %s38 = sadd.s32 %s36, %s32
    %s39 = ssub.s32 %s37, %s38
    %p40 = scmp.eq.s32.totalorder %s39, 0
    %s42 = sadd.s32 %s41, 1
    %s43 = scalar_select %p40, %s41, %s42
    %p46 = pneg %p40
    %p47 = scmp.eq.s32.totalorder %s17, 1
    %p48 = por %p46, %p47
    %p49 = scmp.ne.s32.totalorder %s41, %s44
    %p50 = scmp.eq.s32.totalorder %s17, 0
    %p51 = por %p49, %p50
    %p52 = scmp.ne.s32.totalorder %s41, %s44
    %p53 = scmp.eq.s32.totalorder %s22, 1
    %p54 = por %p52, %p53
    %p55 = scmp.ne.s32.totalorder %s44, %s45
    %p56 = scmp.eq.s32.totalorder %s22, 0
    %p57 = por %p55, %p56
    %p58 = scmp.ne.s32.totalorder %s44, %s45
    %p59 = scmp.eq.s32.totalorder %s23, 1
    %p60 = por %p58, %p59
    %p62 = scmp.ne.s32.totalorder %s45, %s61
    %p63 = scmp.eq.s32.totalorder %s23, 0
    %p64 = por %p62, %p63
    %s65 = sadd.s32 %s24, %s25
    %s66 = sadd.s32 %s36, %s32
    %s67 = ssub.s32 %s65, %s66
    %p68 = scmp.eq.s32.totalorder %s67, 0
    %s70 = sadd.s32 %s69, 1
    %s71 = scalar_select %p68, %s69, %s70
    %p74 = pneg %p68
    %p75 = scmp.eq.s32.totalorder %s17, 1
    %p76 = por %p74, %p75
    %p77 = scmp.ne.s32.totalorder %s69, %s72
    %p78 = scmp.eq.s32.totalorder %s17, 0
    %p79 = por %p77, %p78
    %p80 = scmp.ne.s32.totalorder %s69, %s72
    %p81 = scmp.eq.s32.totalorder %s22, 1
    %p82 = por %p80, %p81
    %p83 = scmp.ne.s32.totalorder %s72, %s73
    %p84 = scmp.eq.s32.totalorder %s22, 0
    %p85 = por %p83, %p84
    %p86 = scmp.ne.s32.totalorder %s72, %s73
    %p87 = scmp.eq.s32.totalorder %s23, 1
    %p88 = por %p86, %p87
    %p90 = scmp.ne.s32.totalorder %s73, %s89
    %p91 = scmp.eq.s32.totalorder %s23, 0
    %p92 = por %p90, %p91
    %s93 = sadd.s32 %s24, %s25
    %s94 = sadd.s32 %s36, %s32
    %s95 = ssub.s32 %s93, %s94
    %p96 = scmp.eq.s32.totalorder %s95, 0
    %s98 = sadd.s32 %s97, 1
    %s99 = scalar_select %p96, %s97, %s98
    %p102 = pneg %p96
    %p103 = scmp.eq.s32.totalorder %s17, 1
    %p104 = por %p102, %p103
    %p105 = scmp.ne.s32.totalorder %s97, %s100
    %p106 = scmp.eq.s32.totalorder %s17, 0
    %p107 = por %p105, %p106
    %p108 = scmp.ne.s32.totalorder %s97, %s100
    %p109 = scmp.eq.s32.totalorder %s22, 1
    %p110 = por %p108, %p109
    %p111 = scmp.ne.s32.totalorder %s100, %s101
    %p112 = scmp.eq.s32.totalorder %s22, 0
    %p113 = por %p111, %p112
    %p114 = scmp.ne.s32.totalorder %s100, %s101
    %p115 = scmp.eq.s32.totalorder %s23, 1
    %p116 = por %p114, %p115
    %p118 = scmp.ne.s32.totalorder %s101, %s117
    %p119 = scmp.eq.s32.totalorder %s23, 0
    %p120 = por %p118, %p119
    %s122 = sadd.s32 %s121, 1
    %p125 = scmp.eq.s32.totalorder %s17, 1
    %p126 = scmp.ne.s32.totalorder %s121, %s123
    %p127 = scmp.eq.s32.totalorder %s17, 0
    %p128 = por %p126, %p127
    %p129 = scmp.ne.s32.totalorder %s121, %s123
    %p130 = scmp.eq.s32.totalorder %s22, 1
    %p131 = por %p129, %p130
    %p132 = scmp.ne.s32.totalorder %s123, %s124
    %p133 = scmp.eq.s32.totalorder %s22, 0
    %p134 = por %p132, %p133
    %p135 = scmp.ne.s32.totalorder %s123, %s124
    %p136 = scmp.eq.s32.totalorder %s23, 1
    %p137 = por %p135, %p136
    %p139 = scmp.ne.s32.totalorder %s124, %s138
    %p140 = scmp.eq.s32.totalorder %s23, 0
    %p141 = por %p139, %p140
    %s143 = sadd.s32 %s142, 1
    %p146 = scmp.eq.s32.totalorder %s17, 1
    %p147 = scmp.ne.s32.totalorder %s142, %s144
    %p148 = scmp.eq.s32.totalorder %s17, 0
    %p149 = por %p147, %p148
    %p150 = scmp.ne.s32.totalorder %s142, %s144
    %p151 = scmp.eq.s32.totalorder %s22, 1
    %p152 = por %p150, %p151
    %p153 = scmp.ne.s32.totalorder %s144, %s145
    %p154 = scmp.eq.s32.totalorder %s22, 0
    %p155 = por %p153, %p154
    %p156 = scmp.ne.s32.totalorder %s144, %s145
    %p157 = scmp.eq.s32.totalorder %s23, 1
    %p158 = por %p156, %p157
    %p160 = scmp.ne.s32.totalorder %s145, %s159
    %p161 = scmp.eq.s32.totalorder %s23, 0
    %p162 = por %p160, %p161
    %s164 = sadd.s32 %s163, 1
    %p167 = scmp.eq.s32.totalorder %s17, 1
    %p168 = scmp.ne.s32.totalorder %s163, %s165
    %p169 = scmp.eq.s32.totalorder %s17, 0
    %p170 = por %p168, %p169
    %p171 = scmp.ne.s32.totalorder %s163, %s165
    %p172 = scmp.eq.s32.totalorder %s22, 1
    %p173 = por %p171, %p172
    %p174 = scmp.ne.s32.totalorder %s165, %s166
    %p175 = scmp.eq.s32.totalorder %s22, 0
    %p176 = por %p174, %p175
    %p177 = scmp.ne.s32.totalorder %s165, %s166
    %p178 = scmp.eq.s32.totalorder %s23, 1
    %p179 = por %p177, %p178
    %p181 = scmp.ne.s32.totalorder %s166, %s180
    %p182 = scmp.eq.s32.totalorder %s23, 0
    %p183 = por %p181, %p182
    %s185 = sadd.s32 %s184, 1
    %p188 = scmp.eq.s32.totalorder %s17, 1
    %p189 = scmp.ne.s32.totalorder %s184, %s186
    %p190 = scmp.eq.s32.totalorder %s17, 0
    %p191 = por %p189, %p190
    %p192 = scmp.ne.s32.totalorder %s184, %s186
    %p193 = scmp.eq.s32.totalorder %s22, 1
    %p194 = por %p192, %p193
    %p195 = scmp.ne.s32.totalorder %s186, %s187
    %p196 = scmp.eq.s32.totalorder %s22, 0
    %p197 = por %p195, %p196
    %p198 = scmp.ne.s32.totalorder %s186, %s187
    %p199 = scmp.eq.s32.totalorder %s23, 1
    %p200 = por %p198, %p199
    %p202 = scmp.ne.s32.totalorder %s187, %s201
    %p203 = scmp.eq.s32.totalorder %s23, 0
    %p204 = por %p202, %p203
    %s206 = sadd.s32 %s205, 1
    %p209 = scmp.eq.s32.totalorder %s17, 1
    %p210 = scmp.ne.s32.totalorder %s205, %s207
    %p211 = scmp.eq.s32.totalorder %s17, 0
    %p212 = por %p210, %p211
    %p213 = scmp.ne.s32.totalorder %s205, %s207
    %p214 = scmp.eq.s32.totalorder %s22, 1
    %p215 = por %p213, %p214
    %p216 = scmp.ne.s32.totalorder %s207, %s208
    %p217 = scmp.eq.s32.totalorder %s22, 0
    %p218 = por %p216, %p217
    %p219 = scmp.ne.s32.totalorder %s207, %s208
    %p220 = scmp.eq.s32.totalorder %s23, 1
    %p221 = por %p219, %p220
    %p223 = scmp.ne.s32.totalorder %s208, %s222
    %p224 = scmp.eq.s32.totalorder %s23, 0
    %p225 = por %p223, %p224
    %s227 = sadd.s32 %s226, 1
    %p230 = scmp.eq.s32.totalorder %s17, 1
    %p231 = scmp.ne.s32.totalorder %s226, %s228
    %p232 = scmp.eq.s32.totalorder %s17, 0
    %p233 = por %p231, %p232
    %p234 = scmp.ne.s32.totalorder %s226, %s228
    %p235 = scmp.eq.s32.totalorder %s22, 1
    %p236 = por %p234, %p235
    %p237 = scmp.ne.s32.totalorder %s228, %s229
    %p238 = scmp.eq.s32.totalorder %s22, 0
    %p239 = por %p237, %p238
    %p240 = scmp.ne.s32.totalorder %s228, %s229
    %p241 = scmp.eq.s32.totalorder %s23, 1
    %p242 = por %p240, %p241
    %p244 = scmp.ne.s32.totalorder %s229, %s243
    %p245 = scmp.eq.s32.totalorder %s23, 0
    %p246 = por %p244, %p245
    %s247 = ssub.s32 %s24, %s36
    %p248 = scmp.eq.s32.totalorder %s247, 0
    %s250 = sadd.s32 %s249, 1
    %s251 = scalar_select %p248, %s249, %s250
    %p254 = pneg %p248
    %p255 = scmp.eq.s32.totalorder %s17, 1
    %p256 = por %p254, %p255
    %p257 = scmp.ne.s32.totalorder %s249, %s252
    %p258 = scmp.eq.s32.totalorder %s17, 0
    %p259 = por %p257, %p258
    %p260 = scmp.ne.s32.totalorder %s249, %s252
    %p261 = scmp.eq.s32.totalorder %s22, 1
    %p262 = por %p260, %p261
    %p263 = scmp.ne.s32.totalorder %s252, %s253
    %p264 = scmp.eq.s32.totalorder %s22, 0
    %p265 = por %p263, %p264
    %p266 = scmp.ne.s32.totalorder %s252, %s253
    %p267 = scmp.eq.s32.totalorder %s23, 1
    %p268 = por %p266, %p267
    %p270 = scmp.ne.s32.totalorder %s253, %s269
    %p271 = scmp.eq.s32.totalorder %s23, 0
    %p272 = por %p270, %p271
    %p273 = scmp.le.s32.totalorder 1, %s17
    %p274 = scmp.lt.s32.totalorder %s17, 3
    %p275 = pnand %p273, %p274
    %p276 = pneg %p275
    // Predicated region
    $region9: #{bce_ranking_loss.1} parent=5 // pred_check
      _
    $region10: #{bce_ranking_loss.1} parent=5 // pred_check_branch
      %278 = sbr.rel (%p275) target = $region12
    $region11: #{bce_ranking_loss.1} parent=5 // pred_region
      %s279 = ssub.s32 %s17, 1
      // Predicated region
      $region13: #{bce_ranking_loss.1} parent=11 // pred_check
        %p280 = pneg %p134
      $region14: #{bce_ranking_loss.1} parent=11 // pred_check_branch
        %282 = sbr.rel (%p280) target = $region16
      $region15: #{bce_ranking_loss.1} parent=11 // pred_region
        _
      $region16: #{bce_ranking_loss.1} parent=11 // pred_fallthru
        _
      // Predicated region
      $region17: #{bce_ranking_loss.1} parent=11 // pred_check
        %p283 = pneg %p155
      $region18: #{bce_ranking_loss.1} parent=11 // pred_check_branch
        %285 = sbr.rel (%p283) target = $region20
      $region19: #{bce_ranking_loss.1} parent=11 // pred_region
        _
      $region20: #{bce_ranking_loss.1} parent=11 // pred_fallthru
        _
      // Predicated region
      $region21: #{bce_ranking_loss.1} parent=11 // pred_check
        %p286 = pneg %p176
      $region22: #{bce_ranking_loss.1} parent=11 // pred_check_branch
        %288 = sbr.rel (%p286) target = $region24
      $region23: #{bce_ranking_loss.1} parent=11 // pred_region
        _
      $region24: #{bce_ranking_loss.1} parent=11 // pred_fallthru
        _
      // Predicated region
      $region25: #{bce_ranking_loss.1} parent=11 // pred_check
        %p289 = pneg %p197
      $region26: #{bce_ranking_loss.1} parent=11 // pred_check_branch
        %291 = sbr.rel (%p289) target = $region28
      $region27: #{bce_ranking_loss.1} parent=11 // pred_region
        _
      $region28: #{bce_ranking_loss.1} parent=11 // pred_fallthru
        _
      // Predicated region
      $region29: #{bce_ranking_loss.1} parent=11 // pred_check
        %p292 = pneg %p218
      $region30: #{bce_ranking_loss.1} parent=11 // pred_check_branch
        %294 = sbr.rel (%p292) target = $region32
      $region31: #{bce_ranking_loss.1} parent=11 // pred_region
        _
      $region32: #{bce_ranking_loss.1} parent=11 // pred_fallthru
        _
      // Predicated region
      $region33: #{bce_ranking_loss.1} parent=11 // pred_check
        %p295 = pneg %p239
      $region34: #{bce_ranking_loss.1} parent=11 // pred_check_branch
        %297 = sbr.rel (%p295) target = $region36
      $region35: #{bce_ranking_loss.1} parent=11 // pred_region
        _
      $region36: #{bce_ranking_loss.1} parent=11 // pred_fallthru
        _
    $region12: #{bce_ranking_loss.1} parent=5 // pred_fallthru
      _
    %p298 = scmp.lt.s32.totalorder %s17, 2
    // Predicated region
    $region37: #{bce_ranking_loss.1} parent=5 // pred_check
      %p299 = pneg %p298
    $region38: #{bce_ranking_loss.1} parent=5 // pred_check_branch
      %301 = sbr.rel (%p299) target = $region40
    $region39: #{bce_ranking_loss.1} parent=5 // pred_region
      // Predicated region
      $region41: #{bce_ranking_loss.1} parent=39 // pred_check
        %p302 = pneg %p51
      $region42: #{bce_ranking_loss.1} parent=39 // pred_check_branch
        %304 = sbr.rel (%p302) target = $region44
      $region43: #{bce_ranking_loss.1} parent=39 // pred_region
        %s305 = sadd.s32 %s24, %s25
        %s306 = smul.u32 4, %s305
        %p307 = scmp.lt.s32.totalorder %s306, 7
        %s308 = scalar_select %p307, %s306, 7
        %s309 = scalar_lea.vmem %s0, %s308
        %s310 = sadd.s32 %s24, %s25
        %s311 = smul.u32 4, %s310
      $region44: #{bce_ranking_loss.1} parent=39 // pred_fallthru
        _
      // Predicated region
      $region45: #{bce_ranking_loss.1} parent=39 // pred_check
        %p312 = pneg %p79
      $region46: #{bce_ranking_loss.1} parent=39 // pred_check_branch
        %314 = sbr.rel (%p312) target = $region48
      $region47: #{bce_ranking_loss.1} parent=39 // pred_region
        %s315 = sadd.s32 %s24, %s25
        %s316 = smul.u32 4, %s315
        %p317 = scmp.lt.s32.totalorder %s316, 7
        %s318 = scalar_select %p317, %s316, 7
        %s319 = scalar_lea.vmem %s1, %s318
        %s320 = sadd.s32 %s24, %s25
        %s321 = smul.u32 4, %s320
      $region48: #{bce_ranking_loss.1} parent=39 // pred_fallthru
        _
      // Predicated region
      $region49: #{bce_ranking_loss.1} parent=39 // pred_check
        %p322 = pneg %p107
      $region50: #{bce_ranking_loss.1} parent=39 // pred_check_branch
        %324 = sbr.rel (%p322) target = $region52
      $region51: #{bce_ranking_loss.1} parent=39 // pred_region
        %s325 = sadd.s32 %s24, %s25
        %s326 = smul.u32 4, %s325
        %p327 = scmp.lt.s32.totalorder %s326, 7
        %s328 = scalar_select %p327, %s326, 7
        %s329 = scalar_lea.vmem %s2, %s328
        %s330 = sadd.s32 %s24, %s25
        %s331 = smul.u32 4, %s330
      $region52: #{bce_ranking_loss.1} parent=39 // pred_fallthru
        _
    $region40: #{bce_ranking_loss.1} parent=5 // pred_fallthru
      _
    %p332 = scmp.le.s32.totalorder 1, %s17
    %p333 = scmp.lt.s32.totalorder %s17, 3
    %p334 = pnand %p332, %p333
    %p335 = pneg %p334
    // Predicated region
    $region53: #{bce_ranking_loss.1} parent=5 // pred_check
      _
    $region54: #{bce_ranking_loss.1} parent=5 // pred_check_branch
      %337 = sbr.rel (%p334) target = $region56
    $region55: #{bce_ranking_loss.1} parent=5 // pred_region
      %s338 = ssub.s32 %s17, 1
      %s339 = sadd.s32 %s26, %s27
      %s340 = smul.u32 4, %s339
      %p341 = scmp.lt.s32.totalorder %s340, 7
      %s342 = scalar_select %p341, %s340, 7
      %s343 = scalar_lea.vmem %s0, %s342
      %p344 = pneg %p57
      %p345 = pneg %p54
      %s346 = sadd.s32 %s26, %s27
      %s347 = smul.u32 4, %s346
      %p348 = scmp.lt.s32.totalorder %s347, 7
      %s349 = scalar_select %p348, %s347, 7
      %s350 = scalar_lea.vmem %s1, %s349
      %p351 = pneg %p85
      %p352 = pneg %p82
      %s353 = sadd.s32 %s26, %s27
      %s354 = smul.u32 4, %s353
      %p355 = scmp.lt.s32.totalorder %s354, 7
      %s356 = scalar_select %p355, %s354, 7
      %s357 = scalar_lea.vmem %s2, %s356
      %p358 = pneg %p113
      %p359 = pneg %p110
      %p360 = pneg %p134
      %p361 = pneg %p131
      %p362 = pneg %p155
      %p363 = pneg %p152
      %p364 = pneg %p176
      %p365 = pneg %p173
      %p366 = pneg %p197
      %p367 = pneg %p194
      %p368 = pneg %p218
      %p369 = pneg %p215
      %p370 = pneg %p239
      %p371 = pneg %p236
      %p372 = pneg %p265
      %p373 = pneg %p262
      %p374 = scmp.lt.s32.totalorder %s26, 1
      %s375 = scalar_select %p374, %s26, 1
      %s376 = smul.addr %s375, 8
      %s377 = scalar_lea.vmem %s9, %s376
      %s378 = sadd.s32 %s26, %s27
      %s379 = smul.u32 4, %s378
      %p380 = scmp.lt.s32.totalorder %s379, 7
      %s381 = scalar_select %p380, %s379, 7
      %s382 = scalar_lea.vmem %s0, %s381
      %s383 = sadd.s32 %s26, %s27
      %s384 = smul.u32 4, %s383
      %s385 = sadd.s32 %s26, %s27
      %s386 = smul.u32 4, %s385
      %p387 = scmp.lt.s32.totalorder %s386, 7
      %s388 = scalar_select %p387, %s386, 7
      %s389 = scalar_lea.vmem %s1, %s388
      %s390 = sadd.s32 %s26, %s27
      %s391 = smul.u32 4, %s390
      %s392 = sadd.s32 %s26, %s27
      %s393 = smul.u32 4, %s392
      %p394 = scmp.lt.s32.totalorder %s393, 7
      %s395 = scalar_select %p394, %s393, 7
      %s396 = scalar_lea.vmem %s2, %s395
      %s397 = sadd.s32 %s26, %s27
      %s398 = smul.u32 4, %s397
      %p399 = scmp.lt.s32.totalorder %s26, 1
      %s400 = scalar_select %p399, %s26, 1
      %s401 = smul.addr %s400, 8
      %s402 = scalar_lea.vmem %s9, %s401
      %p403 = scmp.eq.s32.totalorder %s27, 0
      // Predicated region
      $region57: #{bce_ranking_loss.1} parent=55 // pred_check
        %p404 = pneg %p403
      $region58: #{bce_ranking_loss.1} parent=55 // pred_check_branch
        %406 = sbr.rel (%p404) target = $region60
      $region59: #{bce_ranking_loss.1} parent=55 // pred_region
        %v407 = vlaneseq
        %vm408 = vcmp.ge.s32.totalorder %v407, 0
        %vm409 = vcmp.lt.s32.totalorder %v407, 512
        %vm410 = vmand %vm408, %vm409
        %411 = vst.msk [vmem:[#allocation3] sm:$0xf] %vm410, 0.0
        %412 = vst [vmem:[#allocation2] sm:$0xff] 0.0
        %413 = vst [vmem:[#allocation2 + $0x8] sm:$0xff] 0.0
        %414 = vst [vmem:[#allocation2 + $0x10] sm:$0xff] 0.0
        %415 = vst [vmem:[#allocation2 + $0x18] sm:$0xff] 0.0
      $region60: #{bce_ranking_loss.1} parent=55 // pred_fallthru
        _
      %v416 = vld [vmem:[%s382] sm:$0xf]
      %v417 = vld [vmem:[%s389] sm:$0xf]
      %v418 = vld [vmem:[%s396] sm:$0xf]
      %v419 = vadd.f32 %v418, 1.0
      %v420 = vmul.f32 %v419, 0.5
      %v421 = vadd.f32 %v417, 0.1
      %v422 = vrcp.pop %v421
      %v423 = vmul.f32 %v416, %v422
      %v424 = vadd.f32 %v416, 0.1
      %v425 = vrcp.pop %v424
      %v426 = vmul.f32 %v417, %v425
      %v427 = vlaneseq
      %vm428 = vcmp.ge.s32.totalorder %v427, 0
      %vm429 = vcmp.lt.s32.totalorder %v427, 512
      %vm430 = vmand %vm428, %vm429
      %431 = vst.msk [vmem:[#allocation2] ss:$8 sm:$0xf] %vm430, %v416
      %432 = vst.msk [vmem:[#allocation2] ss:$8 sm:$0x0] %vm430, %v416
      %s433 = scalar_lea.vmem [#allocation2], 1
      %434 = vst.msk [vmem:[%s433] ss:$8 sm:$0xf] %vm430, %v417
      %435 = vst.msk [vmem:[%s433] ss:$8 sm:$0x0] %vm430, %v417
      %s436 = scalar_lea.vmem [#allocation2], 2
      %437 = vst.msk [vmem:[%s436] ss:$8 sm:$0xf] %vm430, %v423
      %438 = vst.msk [vmem:[%s436] ss:$8 sm:$0x0] %vm430, %v423
      %s439 = scalar_lea.vmem [#allocation2], 3
      %440 = vst.msk [vmem:[%s439] ss:$8 sm:$0xf] %vm430, %v426
      %441 = vst.msk [vmem:[%s439] ss:$8 sm:$0x0] %vm430, %v426
      %v442 = vld [vmem:[%s3] sm:$0xff]
      %v443 = vld [vmem:[%s3 + $0x8] sm:$0xff]
      %v444 = vld [vmem:[%s3 + $0x10] sm:$0xff]
      %v445 = vld [vmem:[%s3 + $0x18] sm:$0xff]
      %v446 = vld [vmem:[#allocation2] sm:$0xff]
      %v447 = vld [vmem:[#allocation2 + $0x8] sm:$0xff]
      %v448 = vld [vmem:[#allocation2 + $0x10] sm:$0xff]
      %v449 = vld [vmem:[#allocation2 + $0x18] sm:$0xff]
      %v450 = vld [vmem:[%s4] sm:$0xff]
      %v451 = vld [vmem:[%s4 + $0x8] sm:$0xff]
      %v452 = vld [vmem:[%s4 + $0x10] sm:$0xff]
      %v453 = vld [vmem:[%s4 + $0x18] sm:$0xff]
      %455 = vset.pattern.permute.xlu0 0
      %456 = vperm.xlu0 %455, %v450
      %v457 = vpop.permute.xlu0 %456
      %460 = vset.pattern.permute.xlu0 0
      %461 = vperm.xlu0 %460, %v451
      %v462 = vpop.permute.xlu0 %461
      %465 = vset.pattern.permute.xlu0 0
      %466 = vperm.xlu0 %465, %v452
      %v467 = vpop.permute.xlu0 %466
      %470 = vset.pattern.permute.xlu0 0
      %471 = vperm.xlu0 %470, %v453
      %v472 = vpop.permute.xlu0 %471
      %vm474 = vcmask 64512
      %v476 = vsel %vm474, %v442, 0
      %v479 = vsel %vm474, %v443, 0
      %v482 = vsel %vm474, %v444, 0
      %v485 = vsel %vm474, %v445, 0
      %487 = vmatprep.subr.mxu0 %v447
      %488 = vmatpush1.msra.mxu0 %v446
      %489 = vmatprep.subr.mxu0 0.0
      %490 = vmatpush1.msra.mxu0 0.0
      %491 = vmatprep.subr.mxu0 0.0
      %492 = vmatpush1.msra.mxu0 0.0
      %493 = vmatprep.subr.mxu0 0.0
      %494 = vmatpush1.msra.mxu0 0.0
      %495 = vmatprep.subr.mxu0 0.0
      %496 = vmatpush1.msra.mxu0 0.0
      %497 = vmatprep.subr.mxu0 0.0
      %498 = vmatpush1.msra.mxu0 0.0
      %499 = vmatprep.subr.mxu0 0.0
      %500 = vmatpush1.msra.mxu0 0.0
      %501 = vmatprep.subr.mxu0 0.0
      %502 = vmatpush1.msra.mxu0 0.0
      %503 = vmatprep.subr.mxu0 0.0
      %504 = vmatpush1.msra.mxu0 0.0
      %505 = vmatprep.subr.mxu0 0.0
      %506 = vmatpush1.msra.mxu0 0.0
      %507 = vmatprep.subr.mxu0 0.0
      %508 = vmatpush1.msra.mxu0 0.0
      %509 = vmatprep.subr.mxu0 0.0
      %510 = vmatpush1.msra.mxu0 0.0
      %511 = vmatprep.subr.mxu0 0.0
      %512 = vmatpush1.msra.mxu0 0.0
      %513 = vmatprep.subr.mxu0 0.0
      %514 = vmatpush1.msra.mxu0 0.0
      %515 = vmatprep.subr.mxu0 0.0
      %516 = vmatpush1.msra.mxu0 0.0
      %517 = vmatprep.subr.mxu0 0.0
      %518 = vmatpush1.msra.mxu0 0.0
      %519 = vmatprep.subr.mxu0 0.0
      %520 = vmatpush1.msra.mxu0 0.0
      %521 = vmatprep.subr.mxu0 0.0
      %522 = vmatpush1.msra.mxu0 0.0
      %523 = vmatprep.subr.mxu0 0.0
      %524 = vmatpush1.msra.mxu0 0.0
      %525 = vmatprep.subr.mxu0 0.0
      %526 = vmatpush1.msra.mxu0 0.0
      %527 = vmatprep.subr.mxu0 0.0
      %528 = vmatpush1.msra.mxu0 0.0
      %529 = vmatprep.subr.mxu0 0.0
      %530 = vmatpush1.msra.mxu0 0.0
      %531 = vmatprep.subr.mxu0 0.0
      %532 = vmatpush1.msra.mxu0 0.0
      %533 = vmatprep.subr.mxu0 0.0
      %534 = vmatpush1.msra.mxu0 0.0
      %535 = vmatprep.subr.mxu0 0.0
      %536 = vmatpush1.msra.mxu0 0.0
      %537 = vmatprep.subr.mxu0 0.0
      %538 = vmatpush1.msra.mxu0 0.0
      %539 = vmatprep.subr.mxu0 0.0
      %540 = vmatpush1.msra.mxu0 0.0
      %541 = vmatprep.subr.mxu0 0.0
      %542 = vmatpush1.msra.mxu0 0.0
      %543 = vmatprep.subr.mxu0 0.0
      %544 = vmatpush1.msra.mxu0 0.0
      %545 = vmatprep.subr.mxu0 0.0
      %546 = vmatpush1.msra.mxu0 0.0
      %547 = vmatprep.subr.mxu0 0.0
      %548 = vmatpush1.msra.mxu0 0.0
      %549 = vmatprep.subr.mxu0 0.0
      %550 = vmatpush1.msra.mxu0 0.0
      %551 = vmatprep.mubr.f32.mxu0 0.0
      %552 = vmatmul.mubr.f32.gmra.mrb[0].mxu0 %v476
      %v553 = vpop.f32.mrb[0].mxu0
      %v554 = vadd.f32 %v457, %v553
      %v555 = vpop.f32.mrb[0].mxu0
      %v556 = vadd.f32 %v457, %v555
      %557 = vmatprep.mubr.f32.mxu0 0.0
      %558 = vmatmul.mubr.f32.gmra.mrb[0].mxu0 %v479
      %v559 = vpop.f32.mrb[0].mxu0
      %v560 = vadd.f32 %v462, %v559
      %v561 = vpop.f32.mrb[0].mxu0
      %v562 = vadd.f32 %v462, %v561
      %563 = vmatprep.mubr.f32.mxu0 0.0
      %564 = vmatmul.mubr.f32.gmra.mrb[0].mxu0 %v482
      %v565 = vpop.f32.mrb[0].mxu0
      %v566 = vadd.f32 %v467, %v565
      %v567 = vpop.f32.mrb[0].mxu0
      %v568 = vadd.f32 %v467, %v567
      %569 = vmatprep.mubr.f32.mxu0 0.0
      %570 = vmatmul.mubr.f32.gmra.mrb[0].mxu0 %v485
      %v571 = vpop.f32.mrb[0].mxu0
      %v572 = vadd.f32 %v472, %v571
      %v573 = vpop.f32.mrb[0].mxu0
      %v574 = vadd.f32 %v472, %v573
      %575 = vdwg.mxu0
      %576 = vmatprep.subr.mxu0 %v449
      %577 = vmatpush1.msra.mxu0 %v448
      %578 = vmatprep.subr.mxu0 0.0
      %579 = vmatpush1.msra.mxu0 0.0
      %580 = vmatprep.subr.mxu0 0.0
      %581 = vmatpush1.msra.mxu0 0.0
      %582 = vmatprep.subr.mxu0 0.0
      %583 = vmatpush1.msra.mxu0 0.0
      %584 = vmatprep.subr.mxu0 0.0
      %585 = vmatpush1.msra.mxu0 0.0
      %586 = vmatprep.subr.mxu0 0.0
      %587 = vmatpush1.msra.mxu0 0.0
      %588 = vmatprep.subr.mxu0 0.0
      %589 = vmatpush1.msra.mxu0 0.0
      %590 = vmatprep.subr.mxu0 0.0
      %591 = vmatpush1.msra.mxu0 0.0
      %592 = vmatprep.subr.mxu0 0.0
      %593 = vmatpush1.msra.mxu0 0.0
      %594 = vmatprep.subr.mxu0 0.0
      %595 = vmatpush1.msra.mxu0 0.0
      %596 = vmatprep.subr.mxu0 0.0
      %597 = vmatpush1.msra.mxu0 0.0
      %598 = vmatprep.subr.mxu0 0.0
      %599 = vmatpush1.msra.mxu0 0.0
      %600 = vmatprep.subr.mxu0 0.0
      %601 = vmatpush1.msra.mxu0 0.0
      %602 = vmatprep.subr.mxu0 0.0
      %603 = vmatpush1.msra.mxu0 0.0
      %604 = vmatprep.subr.mxu0 0.0
      %605 = vmatpush1.msra.mxu0 0.0
      %606 = vmatprep.subr.mxu0 0.0
      %607 = vmatpush1.msra.mxu0 0.0
      %608 = vmatprep.subr.mxu0 0.0
      %609 = vmatpush1.msra.mxu0 0.0
      %610 = vmatprep.subr.mxu0 0.0
      %611 = vmatpush1.msra.mxu0 0.0
      %612 = vmatprep.subr.mxu0 0.0
      %613 = vmatpush1.msra.mxu0 0.0
      %614 = vmatprep.subr.mxu0 0.0
      %615 = vmatpush1.msra.mxu0 0.0
      %616 = vmatprep.subr.mxu0 0.0
      %617 = vmatpush1.msra.mxu0 0.0
      %618 = vmatprep.subr.mxu0 0.0
      %619 = vmatpush1.msra.mxu0 0.0
      %620 = vmatprep.subr.mxu0 0.0
      %621 = vmatpush1.msra.mxu0 0.0
      %622 = vmatprep.subr.mxu0 0.0
      %623 = vmatpush1.msra.mxu0 0.0
      %624 = vmatprep.subr.mxu0 0.0
      %625 = vmatpush1.msra.mxu0 0.0
      %626 = vmatprep.subr.mxu0 0.0
      %627 = vmatpush1.msra.mxu0 0.0
      %628 = vmatprep.subr.mxu0 0.0
      %629 = vmatpush1.msra.mxu0 0.0
      %630 = vmatprep.subr.mxu0 0.0
      %631 = vmatpush1.msra.mxu0 0.0
      %632 = vmatprep.subr.mxu0 0.0
      %633 = vmatpush1.msra.mxu0 0.0
      %634 = vmatprep.subr.mxu0 0.0
      %635 = vmatpush1.msra.mxu0 0.0
      %636 = vmatprep.subr.mxu0 0.0
      %637 = vmatpush1.msra.mxu0 0.0
      %638 = vmatprep.subr.mxu0 0.0
      %639 = vmatpush1.msra.mxu0 0.0
      %640 = vmatprep.mubr.f32.mxu0 0.0
      %641 = vmatmul.mubr.f32.gmra.mrb[0].mxu0 %v476
      %v642 = vpop.f32.mrb[0].mxu0
      %v643 = vadd.f32 %v457, %v642
      %v644 = vpop.f32.mrb[0].mxu0
      %v645 = vadd.f32 %v457, %v644
      %646 = vmatprep.mubr.f32.mxu0 0.0
      %647 = vmatmul.mubr.f32.gmra.mrb[0].mxu0 %v479
      %v648 = vpop.f32.mrb[0].mxu0
      %v649 = vadd.f32 %v462, %v648
      %v650 = vpop.f32.mrb[0].mxu0
      %v651 = vadd.f32 %v462, %v650
      %652 = vmatprep.mubr.f32.mxu0 0.0
      %653 = vmatmul.mubr.f32.gmra.mrb[0].mxu0 %v482
      %v654 = vpop.f32.mrb[0].mxu0
      %v655 = vadd.f32 %v467, %v654
      %v656 = vpop.f32.mrb[0].mxu0
      %v657 = vadd.f32 %v467, %v656
      %658 = vmatprep.mubr.f32.mxu0 0.0
      %659 = vmatmul.mubr.f32.gmra.mrb[0].mxu0 %v485
      %v660 = vpop.f32.mrb[0].mxu0
      %v661 = vadd.f32 %v472, %v660
      %v662 = vpop.f32.mrb[0].mxu0
      %v663 = vadd.f32 %v472, %v662
      %664 = vdwg.mxu0
      %vm665 = vcmp.ge.f32.partialorder %v554, 0.0
      %vm666 = vcmp.ge.f32.partialorder %v556, 0.0
      %vm667 = vcmp.ge.f32.partialorder %v643, 0.0
      %vm668 = vcmp.ge.f32.partialorder %v645, 0.0
      %vm669 = vcmp.ge.f32.partialorder %v560, 0.0
      %vm670 = vcmp.ge.f32.partialorder %v562, 0.0
      %vm671 = vcmp.ge.f32.partialorder %v649, 0.0
      %vm672 = vcmp.ge.f32.partialorder %v651, 0.0
      %vm673 = vcmp.ge.f32.partialorder %v566, 0.0
      %vm674 = vcmp.ge.f32.partialorder %v568, 0.0
      %vm675 = vcmp.ge.f32.partialorder %v655, 0.0
      %vm676 = vcmp.ge.f32.partialorder %v657, 0.0
      %vm677 = vcmp.ge.f32.partialorder %v572, 0.0
      %vm678 = vcmp.ge.f32.partialorder %v574, 0.0
      %vm679 = vcmp.ge.f32.partialorder %v661, 0.0
      %vm680 = vcmp.ge.f32.partialorder %v663, 0.0
      %v681 = vmul.f32 %v554, 0.2
      %v682 = vmul.f32 %v556, 0.2
      %v683 = vmul.f32 %v643, 0.2
      %v684 = vmul.f32 %v645, 0.2
      %v685 = vmul.f32 %v560, 0.2
      %v686 = vmul.f32 %v562, 0.2
      %v687 = vmul.f32 %v649, 0.2
      %v688 = vmul.f32 %v651, 0.2
      %v689 = vmul.f32 %v566, 0.2
      %v690 = vmul.f32 %v568, 0.2
      %v691 = vmul.f32 %v655, 0.2
      %v692 = vmul.f32 %v657, 0.2
      %v693 = vmul.f32 %v572, 0.2
      %v694 = vmul.f32 %v574, 0.2
      %v695 = vmul.f32 %v661, 0.2
      %v696 = vmul.f32 %v663, 0.2
      %v697 = vsel %vm665, %v554, %v681
      %v698 = vsel %vm666, %v556, %v682
      %v699 = vsel %vm667, %v643, %v683
      %v700 = vsel %vm668, %v645, %v684
      %v701 = vsel %vm669, %v560, %v685
      %v702 = vsel %vm670, %v562, %v686
      %v703 = vsel %vm671, %v649, %v687
      %v704 = vsel %vm672, %v651, %v688
      %v705 = vsel %vm673, %v566, %v689
      %v706 = vsel %vm674, %v568, %v690
      %v707 = vsel %vm675, %v655, %v691
      %v708 = vsel %vm676, %v657, %v692
      %v709 = vsel %vm677, %v572, %v693
      %v710 = vsel %vm678, %v574, %v694
      %v711 = vsel %vm679, %v661, %v695
      %v712 = vsel %vm680, %v663, %v696
      %v713 = vld [vmem:[%s5] sm:$0xff]
      %v714 = vld [vmem:[%s5 + $0x8] sm:$0xff]
      %v715 = vld [vmem:[%s5 + $0x10] sm:$0xff]
      %v716 = vld [vmem:[%s5 + $0x18] sm:$0xff]
      %v717 = vld [vmem:[%s6] sm:$0xff]
      %v718 = vld [vmem:[%s6 + $0x8] sm:$0xff]
      %v719 = vld [vmem:[%s6 + $0x10] sm:$0xff]
      %v720 = vld [vmem:[%s6 + $0x18] sm:$0xff]
      %722 = vset.pattern.permute.xlu0 0
      %723 = vperm.xlu0 %722, %v717
      %v724 = vpop.permute.xlu0 %723
      %727 = vset.pattern.permute.xlu0 0
      %728 = vperm.xlu0 %727, %v718
      %v729 = vpop.permute.xlu0 %728
      %732 = vset.pattern.permute.xlu0 0
      %733 = vperm.xlu0 %732, %v719
      %v734 = vpop.permute.xlu0 %733
      %737 = vset.pattern.permute.xlu0 0
      %738 = vperm.xlu0 %737, %v720
      %v739 = vpop.permute.xlu0 %738
      %vm741 = vcmask 261120
      %v743 = vsel %vm741, %v713, 0
      %v746 = vsel %vm741, %v714, 0
      %v749 = vsel %vm741, %v715, 0
      %v752 = vsel %vm741, %v716, 0
      %754 = vmatprep.subr.mxu0 %v698
      %755 = vmatpush1.msra.mxu0 %v697
      %756 = vmatprep.subr.mxu0 %v702
      %757 = vmatpush1.msra.mxu0 %v701
      %758 = vmatprep.subr.mxu0 %v706
      %759 = vmatpush1.msra.mxu0 %v705
      %760 = vmatprep.subr.mxu0 %v710
      %761 = vmatpush1.msra.mxu0 %v709
      %762 = vmatprep.subr.mxu0 0.0
      %763 = vmatpush1.msra.mxu0 0.0
      %764 = vmatprep.subr.mxu0 0.0
      %765 = vmatpush1.msra.mxu0 0.0
      %766 = vmatprep.subr.mxu0 0.0
      %767 = vmatpush1.msra.mxu0 0.0
      %768 = vmatprep.subr.mxu0 0.0
      %769 = vmatpush1.msra.mxu0 0.0
      %770 = vmatprep.subr.mxu0 0.0
      %771 = vmatpush1.msra.mxu0 0.0
      %772 = vmatprep.subr.mxu0 0.0
      %773 = vmatpush1.msra.mxu0 0.0
      %774 = vmatprep.subr.mxu0 0.0
      %775 = vmatpush1.msra.mxu0 0.0
      %776 = vmatprep.subr.mxu0 0.0
      %777 = vmatpush1.msra.mxu0 0.0
      %778 = vmatprep.subr.mxu0 0.0
      %779 = vmatpush1.msra.mxu0 0.0
      %780 = vmatprep.subr.mxu0 0.0
      %781 = vmatpush1.msra.mxu0 0.0
      %782 = vmatprep.subr.mxu0 0.0
      %783 = vmatpush1.msra.mxu0 0.0
      %784 = vmatprep.subr.mxu0 0.0
      %785 = vmatpush1.msra.mxu0 0.0
      %786 = vmatprep.subr.mxu0 0.0
      %787 = vmatpush1.msra.mxu0 0.0
      %788 = vmatprep.subr.mxu0 0.0
      %789 = vmatpush1.msra.mxu0 0.0
      %790 = vmatprep.subr.mxu0 0.0
      %791 = vmatpush1.msra.mxu0 0.0
      %792 = vmatprep.subr.mxu0 0.0
      %793 = vmatpush1.msra.mxu0 0.0
      %794 = vmatprep.subr.mxu0 0.0
      %795 = vmatpush1.msra.mxu0 0.0
      %796 = vmatprep.subr.mxu0 0.0
      %797 = vmatpush1.msra.mxu0 0.0
      %798 = vmatprep.subr.mxu0 0.0
      %799 = vmatpush1.msra.mxu0 0.0
      %800 = vmatprep.subr.mxu0 0.0
      %801 = vmatpush1.msra.mxu0 0.0
      %802 = vmatprep.subr.mxu0 0.0
      %803 = vmatpush1.msra.mxu0 0.0
      %804 = vmatprep.subr.mxu0 0.0
      %805 = vmatpush1.msra.mxu0 0.0
      %806 = vmatprep.subr.mxu0 0.0
      %807 = vmatpush1.msra.mxu0 0.0
      %808 = vmatprep.subr.mxu0 0.0
      %809 = vmatpush1.msra.mxu0 0.0
      %810 = vmatprep.subr.mxu0 0.0
      %811 = vmatpush1.msra.mxu0 0.0
      %812 = vmatprep.subr.mxu0 0.0
      %813 = vmatpush1.msra.mxu0 0.0
      %814 = vmatprep.subr.mxu0 0.0
      %815 = vmatpush1.msra.mxu0 0.0
      %816 = vmatprep.subr.mxu0 0.0
      %817 = vmatpush1.msra.mxu0 0.0
      %818 = vmatprep.mubr.f32.mxu0 0.0
      %819 = vmatmul.mubr.f32.gmra.mrb[0].mxu0 %v743
      %v820 = vpop.f32.mrb[0].mxu0
      %v821 = vadd.f32 %v724, %v820
      %v822 = vpop.f32.mrb[0].mxu0
      %v823 = vadd.f32 %v724, %v822
      %824 = vmatprep.mubr.f32.mxu0 0.0
      %825 = vmatmul.mubr.f32.gmra.mrb[0].mxu0 %v746
      %v826 = vpop.f32.mrb[0].mxu0
      %v827 = vadd.f32 %v729, %v826
      %v828 = vpop.f32.mrb[0].mxu0
      %v829 = vadd.f32 %v729, %v828
      %830 = vmatprep.mubr.f32.mxu0 0.0
      %831 = vmatmul.mubr.f32.gmra.mrb[0].mxu0 %v749
      %v832 = vpop.f32.mrb[0].mxu0
      %v833 = vadd.f32 %v734, %v832
      %v834 = vpop.f32.mrb[0].mxu0
      %v835 = vadd.f32 %v734, %v834
      %836 = vmatprep.mubr.f32.mxu0 0.0
      %837 = vmatmul.mubr.f32.gmra.mrb[0].mxu0 %v752
      %v838 = vpop.f32.mrb[0].mxu0
      %v839 = vadd.f32 %v739, %v838
      %v840 = vpop.f32.mrb[0].mxu0
      %v841 = vadd.f32 %v739, %v840
      %842 = vdwg.mxu0
      %843 = vmatprep.subr.mxu0 %v700
      %844 = vmatpush1.msra.mxu0 %v699
      %845 = vmatprep.subr.mxu0 %v704
      %846 = vmatpush1.msra.mxu0 %v703
      %847 = vmatprep.subr.mxu0 %v708
      %848 = vmatpush1.msra.mxu0 %v707
      %849 = vmatprep.subr.mxu0 %v712
      %850 = vmatpush1.msra.mxu0 %v711
      %851 = vmatprep.subr.mxu0 0.0
      %852 = vmatpush1.msra.mxu0 0.0
      %853 = vmatprep.subr.mxu0 0.0
      %854 = vmatpush1.msra.mxu0 0.0
      %855 = vmatprep.subr.mxu0 0.0
      %856 = vmatpush1.msra.mxu0 0.0
      %857 = vmatprep.subr.mxu0 0.0
      %858 = vmatpush1.msra.mxu0 0.0
      %859 = vmatprep.subr.mxu0 0.0
      %860 = vmatpush1.msra.mxu0 0.0
      %861 = vmatprep.subr.mxu0 0.0
      %862 = vmatpush1.msra.mxu0 0.0
      %863 = vmatprep.subr.mxu0 0.0
      %864 = vmatpush1.msra.mxu0 0.0
      %865 = vmatprep.subr.mxu0 0.0
      %866 = vmatpush1.msra.mxu0 0.0
      %867 = vmatprep.subr.mxu0 0.0
      %868 = vmatpush1.msra.mxu0 0.0
      %869 = vmatprep.subr.mxu0 0.0
      %870 = vmatpush1.msra.mxu0 0.0
      %871 = vmatprep.subr.mxu0 0.0
      %872 = vmatpush1.msra.mxu0 0.0
      %873 = vmatprep.subr.mxu0 0.0
      %874 = vmatpush1.msra.mxu0 0.0
      %875 = vmatprep.subr.mxu0 0.0
      %876 = vmatpush1.msra.mxu0 0.0
      %877 = vmatprep.subr.mxu0 0.0
      %878 = vmatpush1.msra.mxu0 0.0
      %879 = vmatprep.subr.mxu0 0.0
      %880 = vmatpush1.msra.mxu0 0.0
      %881 = vmatprep.subr.mxu0 0.0
      %882 = vmatpush1.msra.mxu0 0.0
      %883 = vmatprep.subr.mxu0 0.0
      %884 = vmatpush1.msra.mxu0 0.0
      %885 = vmatprep.subr.mxu0 0.0
      %886 = vmatpush1.msra.mxu0 0.0
      %887 = vmatprep.subr.mxu0 0.0
      %888 = vmatpush1.msra.mxu0 0.0
      %889 = vmatprep.subr.mxu0 0.0
      %890 = vmatpush1.msra.mxu0 0.0
      %891 = vmatprep.subr.mxu0 0.0
      %892 = vmatpush1.msra.mxu0 0.0
      %893 = vmatprep.subr.mxu0 0.0
      %894 = vmatpush1.msra.mxu0 0.0
      %895 = vmatprep.subr.mxu0 0.0
      %896 = vmatpush1.msra.mxu0 0.0
      %897 = vmatprep.subr.mxu0 0.0
      %898 = vmatpush1.msra.mxu0 0.0
      %899 = vmatprep.subr.mxu0 0.0
      %900 = vmatpush1.msra.mxu0 0.0
      %901 = vmatprep.subr.mxu0 0.0
      %902 = vmatpush1.msra.mxu0 0.0
      %903 = vmatprep.subr.mxu0 0.0
      %904 = vmatpush1.msra.mxu0 0.0
      %905 = vmatprep.subr.mxu0 0.0
      %906 = vmatpush1.msra.mxu0 0.0
      %907 = vmatprep.mubr.f32.mxu0 0.0
      %908 = vmatmul.mubr.f32.gmra.mrb[0].mxu0 %v743
      %v909 = vpop.f32.mrb[0].mxu0
      %v910 = vadd.f32 %v724, %v909
      %v911 = vpop.f32.mrb[0].mxu0
      %v912 = vadd.f32 %v724, %v911
      %913 = vmatprep.mubr.f32.mxu0 0.0
      %914 = vmatmul.mubr.f32.gmra.mrb[0].mxu0 %v746
      %v915 = vpop.f32.mrb[0].mxu0
      %v916 = vadd.f32 %v729, %v915
      %v917 = vpop.f32.mrb[0].mxu0
      %v918 = vadd.f32 %v729, %v917
      %919 = vmatprep.mubr.f32.mxu0 0.0
      %920 = vmatmul.mubr.f32.gmra.mrb[0].mxu0 %v749
      %v921 = vpop.f32.mrb[0].mxu0
      %v922 = vadd.f32 %v734, %v921
      %v923 = vpop.f32.mrb[0].mxu0
      %v924 = vadd.f32 %v734, %v923
      %925 = vmatprep.mubr.f32.mxu0 0.0
      %926 = vmatmul.mubr.f32.gmra.mrb[0].mxu0 %v752
      %v927 = vpop.f32.mrb[0].mxu0
      %v928 = vadd.f32 %v739, %v927
      %v929 = vpop.f32.mrb[0].mxu0
      %v930 = vadd.f32 %v739, %v929
      %931 = vdwg.mxu0
      %vm932 = vcmp.ge.f32.partialorder %v821, 0.0
      %vm933 = vcmp.ge.f32.partialorder %v823, 0.0
      %vm934 = vcmp.ge.f32.partialorder %v910, 0.0
      %vm935 = vcmp.ge.f32.partialorder %v912, 0.0
      %vm936 = vcmp.ge.f32.partialorder %v827, 0.0
      %vm937 = vcmp.ge.f32.partialorder %v829, 0.0
      %vm938 = vcmp.ge.f32.partialorder %v916, 0.0
      %vm939 = vcmp.ge.f32.partialorder %v918, 0.0
      %vm940 = vcmp.ge.f32.partialorder %v833, 0.0
      %vm941 = vcmp.ge.f32.partialorder %v835, 0.0
      %vm942 = vcmp.ge.f32.partialorder %v922, 0.0
      %vm943 = vcmp.ge.f32.partialorder %v924, 0.0
      %vm944 = vcmp.ge.f32.partialorder %v839, 0.0
      %vm945 = vcmp.ge.f32.partialorder %v841, 0.0
      %vm946 = vcmp.ge.f32.partialorder %v928, 0.0
      %vm947 = vcmp.ge.f32.partialorder %v930, 0.0
      %v948 = vmul.f32 %v821, 0.2
      %v949 = vmul.f32 %v823, 0.2
      %v950 = vmul.f32 %v910, 0.2
      %v951 = vmul.f32 %v912, 0.2
      %v952 = vmul.f32 %v827, 0.2
      %v953 = vmul.f32 %v829, 0.2
      %v954 = vmul.f32 %v916, 0.2
      %v955 = vmul.f32 %v918, 0.2
      %v956 = vmul.f32 %v833, 0.2
      %v957 = vmul.f32 %v835, 0.2
      %v958 = vmul.f32 %v922, 0.2
      %v959 = vmul.f32 %v924, 0.2
      %v960 = vmul.f32 %v839, 0.2
      %v961 = vmul.f32 %v841, 0.2
      %v962 = vmul.f32 %v928, 0.2
      %v963 = vmul.f32 %v930, 0.2
      %v964 = vsel %vm932, %v821, %v948
      %v965 = vsel %vm933, %v823, %v949
      %v966 = vsel %vm934, %v910, %v950
      %v967 = vsel %vm935, %v912, %v951
      %v968 = vsel %vm936, %v827, %v952
      %v969 = vsel %vm937, %v829, %v953
      %v970 = vsel %vm938, %v916, %v954
      %v971 = vsel %vm939, %v918, %v955
      %v972 = vsel %vm940, %v833, %v956
      %v973 = vsel %vm941, %v835, %v957
      %v974 = vsel %vm942, %v922, %v958
      %v975 = vsel %vm943, %v924, %v959
      %v976 = vsel %vm944, %v839, %v960
      %v977 = vsel %vm945, %v841, %v961
      %v978 = vsel %vm946, %v928, %v962
      %v979 = vsel %vm947, %v930, %v963
      %v980 = vld [vmem:[%s7] sm:$0xff]
      %v982 = vsel %vm741, %v980, 0
      %984 = vmatprep.subr.mxu0 %v965
      %985 = vmatpush1.msra.mxu0 %v964
      %986 = vmatprep.subr.mxu0 %v969
      %987 = vmatpush1.msra.mxu0 %v968
      %988 = vmatprep.subr.mxu0 %v973
      %989 = vmatpush1.msra.mxu0 %v972
      %990 = vmatprep.subr.mxu0 %v977
      %991 = vmatpush1.msra.mxu0 %v976
      %992 = vmatprep.subr.mxu0 0.0
      %993 = vmatpush1.msra.mxu0 0.0
      %994 = vmatprep.subr.mxu0 0.0
      %995 = vmatpush1.msra.mxu0 0.0
      %996 = vmatprep.subr.mxu0 0.0
      %997 = vmatpush1.msra.mxu0 0.0
      %998 = vmatprep.subr.mxu0 0.0
      %999 = vmatpush1.msra.mxu0 0.0
      %1000 = vmatprep.subr.mxu0 0.0
      %1001 = vmatpush1.msra.mxu0 0.0
      %1002 = vmatprep.subr.mxu0 0.0
      %1003 = vmatpush1.msra.mxu0 0.0
      %1004 = vmatprep.subr.mxu0 0.0
      %1005 = vmatpush1.msra.mxu0 0.0
      %1006 = vmatprep.subr.mxu0 0.0
      %1007 = vmatpush1.msra.mxu0 0.0
      %1008 = vmatprep.subr.mxu0 0.0
      %1009 = vmatpush1.msra.mxu0 0.0
      %1010 = vmatprep.subr.mxu0 0.0
      %1011 = vmatpush1.msra.mxu0 0.0
      %1012 = vmatprep.subr.mxu0 0.0
      %1013 = vmatpush1.msra.mxu0 0.0
      %1014 = vmatprep.subr.mxu0 0.0
      %1015 = vmatpush1.msra.mxu0 0.0
      %1016 = vmatprep.subr.mxu0 0.0
      %1017 = vmatpush1.msra.mxu0 0.0
      %1018 = vmatprep.subr.mxu0 0.0
      %1019 = vmatpush1.msra.mxu0 0.0
      %1020 = vmatprep.subr.mxu0 0.0
      %1021 = vmatpush1.msra.mxu0 0.0
      %1022 = vmatprep.subr.mxu0 0.0
      %1023 = vmatpush1.msra.mxu0 0.0
      %1024 = vmatprep.subr.mxu0 0.0
      %1025 = vmatpush1.msra.mxu0 0.0
      %1026 = vmatprep.subr.mxu0 0.0
      %1027 = vmatpush1.msra.mxu0 0.0
      %1028 = vmatprep.subr.mxu0 0.0
      %1029 = vmatpush1.msra.mxu0 0.0
      %1030 = vmatprep.subr.mxu0 0.0
      %1031 = vmatpush1.msra.mxu0 0.0
      %1032 = vmatprep.subr.mxu0 0.0
      %1033 = vmatpush1.msra.mxu0 0.0
      %1034 = vmatprep.subr.mxu0 0.0
      %1035 = vmatpush1.msra.mxu0 0.0
      %1036 = vmatprep.subr.mxu0 0.0
      %1037 = vmatpush1.msra.mxu0 0.0
      %1038 = vmatprep.subr.mxu0 0.0
      %1039 = vmatpush1.msra.mxu0 0.0
      %1040 = vmatprep.subr.mxu0 0.0
      %1041 = vmatpush1.msra.mxu0 0.0
      %1042 = vmatprep.subr.mxu0 0.0
      %1043 = vmatpush1.msra.mxu0 0.0
      %1044 = vmatprep.subr.mxu0 0.0
      %1045 = vmatpush1.msra.mxu0 0.0
      %1046 = vmatprep.subr.mxu0 0.0
      %1047 = vmatpush1.msra.mxu0 0.0
      %1048 = vmatprep.mubr.f32.mxu0 0.0
      %1049 = vmatmul.mubr.f32.gmra.mrb[0].mxu0 %v982
      %v1050 = vpop.f32.mrb[0].mxu0
      %v1051 = vadd.f32 0.0, %v1050
      %v1052 = vpop.f32.mrb[0].mxu0
      %v1053 = vadd.f32 0.0, %v1052
      %1054 = vdwg.mxu0
      %1055 = vmatprep.subr.mxu0 %v967
      %1056 = vmatpush1.msra.mxu0 %v966
      %1057 = vmatprep.subr.mxu0 %v971
      %1058 = vmatpush1.msra.mxu0 %v970
      %1059 = vmatprep.subr.mxu0 %v975
      %1060 = vmatpush1.msra.mxu0 %v974
      %1061 = vmatprep.subr.mxu0 %v979
      %1062 = vmatpush1.msra.mxu0 %v978
      %1063 = vmatprep.subr.mxu0 0.0
      %1064 = vmatpush1.msra.mxu0 0.0
      %1065 = vmatprep.subr.mxu0 0.0
      %1066 = vmatpush1.msra.mxu0 0.0
      %1067 = vmatprep.subr.mxu0 0.0
      %1068 = vmatpush1.msra.mxu0 0.0
      %1069 = vmatprep.subr.mxu0 0.0
      %1070 = vmatpush1.msra.mxu0 0.0
      %1071 = vmatprep.subr.mxu0 0.0
      %1072 = vmatpush1.msra.mxu0 0.0
      %1073 = vmatprep.subr.mxu0 0.0
      %1074 = vmatpush1.msra.mxu0 0.0
      %1075 = vmatprep.subr.mxu0 0.0
      %1076 = vmatpush1.msra.mxu0 0.0
      %1077 = vmatprep.subr.mxu0 0.0
      %1078 = vmatpush1.msra.mxu0 0.0
      %1079 = vmatprep.subr.mxu0 0.0
      %1080 = vmatpush1.msra.mxu0 0.0
      %1081 = vmatprep.subr.mxu0 0.0
      %1082 = vmatpush1.msra.mxu0 0.0
      %1083 = vmatprep.subr.mxu0 0.0
      %1084 = vmatpush1.msra.mxu0 0.0
      %1085 = vmatprep.subr.mxu0 0.0
      %1086 = vmatpush1.msra.mxu0 0.0
      %1087 = vmatprep.subr.mxu0 0.0
      %1088 = vmatpush1.msra.mxu0 0.0
      %1089 = vmatprep.subr.mxu0 0.0
      %1090 = vmatpush1.msra.mxu0 0.0
      %1091 = vmatprep.subr.mxu0 0.0
      %1092 = vmatpush1.msra.mxu0 0.0
      %1093 = vmatprep.subr.mxu0 0.0
      %1094 = vmatpush1.msra.mxu0 0.0
      %1095 = vmatprep.subr.mxu0 0.0
      %1096 = vmatpush1.msra.mxu0 0.0
      %1097 = vmatprep.subr.mxu0 0.0
      %1098 = vmatpush1.msra.mxu0 0.0
      %1099 = vmatprep.subr.mxu0 0.0
      %1100 = vmatpush1.msra.mxu0 0.0
      %1101 = vmatprep.subr.mxu0 0.0
      %1102 = vmatpush1.msra.mxu0 0.0
      %1103 = vmatprep.subr.mxu0 0.0
      %1104 = vmatpush1.msra.mxu0 0.0
      %1105 = vmatprep.subr.mxu0 0.0
      %1106 = vmatpush1.msra.mxu0 0.0
      %1107 = vmatprep.subr.mxu0 0.0
      %1108 = vmatpush1.msra.mxu0 0.0
      %1109 = vmatprep.subr.mxu0 0.0
      %1110 = vmatpush1.msra.mxu0 0.0
      %1111 = vmatprep.subr.mxu0 0.0
      %1112 = vmatpush1.msra.mxu0 0.0
      %1113 = vmatprep.subr.mxu0 0.0
      %1114 = vmatpush1.msra.mxu0 0.0
      %1115 = vmatprep.subr.mxu0 0.0
      %1116 = vmatpush1.msra.mxu0 0.0
      %1117 = vmatprep.subr.mxu0 0.0
      %1118 = vmatpush1.msra.mxu0 0.0
      %1119 = vmatprep.mubr.f32.mxu0 0.0
      %1120 = vmatmul.mubr.f32.gmra.mrb[0].mxu0 %v982
      %v1121 = vpop.f32.mrb[0].mxu0
      %v1122 = vadd.f32 0.0, %v1121
      %v1123 = vpop.f32.mrb[0].mxu0
      %v1124 = vadd.f32 0.0, %v1123
      %1125 = vdwg.mxu0
      %v1126 = vld [vmem:[#allocation4] sm:$0x1]
      %1128 = vset.pattern.permute.xlu0 0
      %1129 = vperm.xlu0 %1128, %v1126
      %v1130 = vpop.permute.xlu0 %1129
      %v1132 = vlaneseq
      %v1133 = vshrl.u32 %v1132, 7
      %v1134 = vsub.s32 0, %v1133
      %v1135 = vrot.slane %v1130, %v1134
      %v1136 = vadd.f32 %v1051, %v1135
      %v1137 = vadd.f32 %v1053, %v1135
      %v1138 = vadd.f32 %v1122, %v1135
      %v1139 = vadd.f32 %v1124, %v1135
      %v1140 = vmax.f32 %v1136, 0.0
      %v1141 = vmax.f32 %v1137, 0.0
      %v1142 = vmax.f32 %v1138, 0.0
      %v1143 = vmax.f32 %v1139, 0.0
      %v1148 = vcombine.low %v1136, %v1137
      %v1149 = vcombine.low %v1138, %v1139
      %v1151 = vunpack.c.l.s4 1966171168
      %v1152 = vunpack.c.0.s8 %v1151
      %v1153 = vlaneseq
      %v1154 = vshrl.u32 %v1153, 7
      %v1155 = vsub.s32 %v1152, %v1154
      %v1156 = vrot.slane %v1148, %v1155
      %v1158 = vunpack.c.l.s4 1966171168
      %v1159 = vunpack.c.0.s8 %v1158
      %v1160 = vlaneseq
      %v1161 = vshrl.u32 %v1160, 7
      %v1162 = vsub.s32 %v1159, %v1161
      %v1163 = vrot.slane %v1149, %v1162
      %v1164 = vcombine.low %v1156, %v1163
      %v1166 = vunpack.c.l.s4 1966171168
      %v1167 = vunpack.c.0.s8 %v1166
      %v1168 = vlaneseq
      %v1169 = vshrl.u32 %v1168, 7
      %v1170 = vsub.s32 %v1167, %v1169
      %v1171 = vrot.slane %v1164, %v1170
      %v1173 = vmul.f32 %v420, %v1171
      %v1175 = vlaneseq
      %v1176 = vshrl.u32 %v1175, 7
      %v1177 = vsub.s32 0, %v1176
      %v1178 = vrot.slane %v1173, %v1177
      %v1179 = vlaneseq
      %v1180 = vshrl.u32 %v1179, 7
      %v1181 = vsub.s32 1, %v1180
      %v1182 = vrot.slane %v1173, %v1181
      %v1183 = vlaneseq
      %v1184 = vshrl.u32 %v1183, 7
      %v1185 = vsub.s32 2, %v1184
      %v1186 = vrot.slane %v1173, %v1185
      %v1187 = vlaneseq
      %v1188 = vshrl.u32 %v1187, 7
      %v1189 = vsub.s32 3, %v1188
      %v1190 = vrot.slane %v1173, %v1189
      %v1195 = vsub.f32 %v1140, %v1178
      %v1196 = vsub.f32 %v1141, %v1182
      %v1197 = vsub.f32 %v1142, %v1186
      %v1198 = vsub.f32 %v1143, %v1190
      %v1199 = vand.u32 2147483647, %v1136
      %v1200 = vand.u32 2147483647, %v1137
      %v1201 = vand.u32 2147483647, %v1138
      %v1202 = vand.u32 2147483647, %v1139
      %v1203 = vsub.f32 0.0, %v1199
      %v1204 = vsub.f32 0.0, %v1200
      %v1205 = vsub.f32 0.0, %v1201
      %v1206 = vsub.f32 0.0, %v1202
      %v1207 = vmul.f32 %v1203, 1.442695
      %v1208 = vpow.pop %v1207
      %v1209 = vmul.f32 %v1204, 1.442695
      %v1210 = vpow.pop %v1209
      %v1211 = vmul.f32 %v1205, 1.442695
      %v1212 = vpow.pop %v1211
      %v1213 = vmul.f32 %v1206, 1.442695
      %v1214 = vpow.pop %v1213
      %v1215 = vadd.f32 %v1208, 1.0
      %v1216 = vadd.f32 %v1210, 1.0
      %v1217 = vadd.f32 %v1212, 1.0
      %v1218 = vadd.f32 %v1214, 1.0
      %v1219 = vlog2.pop %v1215
      %v1220 = vmul.f32 %v1219, 0.6931472
      %v1221 = vlog2.pop %v1216
      %v1222 = vmul.f32 %v1221, 0.6931472
      %v1223 = vlog2.pop %v1217
      %v1224 = vmul.f32 %v1223, 0.6931472
      %v1225 = vlog2.pop %v1218
      %v1226 = vmul.f32 %v1225, 0.6931472
      %v1227 = vadd.f32 %v1195, %v1220
      %v1228 = vadd.f32 %v1196, %v1222
      %v1229 = vadd.f32 %v1197, %v1224
      %v1230 = vadd.f32 %v1198, %v1226
      %v1231 = vlaneseq
      %v1232 = vand.u32 %v1231, 127
      %v1233 = vadd.s32 %v1232, 128
      %v1234 = vadd.s32 %v1232, 256
      %v1235 = vadd.s32 %v1232, 384
      %s1236 = sadd.s32 %s26, %s27
      %s1237 = smul.u32 %s1236, 512
      %v1238 = vstv %s1237
      %v1239 = vadd.s32 %v1232, %v1238
      %v1240 = vadd.s32 %v1233, %v1238
      %v1241 = vadd.s32 %v1234, %v1238
      %v1242 = vadd.s32 %v1235, %v1238
      %vm1243 = vcmp.lt.s32.totalorder %v1239, 512
      %vm1244 = vcmp.lt.s32.totalorder %v1240, 512
      %vm1245 = vcmp.lt.s32.totalorder %v1241, 512
      %vm1246 = vcmp.lt.s32.totalorder %v1242, 512
      %v1247 = vld [vmem:[#allocation3] sm:$0xf]
      %v1248 = vsel %vm1243, %v1227, 0.0
      %v1249 = vsel %vm1244, %v1228, 0.0
      %v1250 = vsel %vm1245, %v1229, 0.0
      %v1251 = vsel %vm1246, %v1230, 0.0
      %v1256 = vcombine.low %v1248, %v1249
      %v1257 = vcombine.low %v1250, %v1251
      %v1259 = vunpack.c.l.s4 1966171168
      %v1260 = vunpack.c.0.s8 %v1259
      %v1261 = vlaneseq
      %v1262 = vshrl.u32 %v1261, 7
      %v1263 = vsub.s32 %v1260, %v1262
      %v1264 = vrot.slane %v1256, %v1263
      %v1266 = vunpack.c.l.s4 1966171168
      %v1267 = vunpack.c.0.s8 %v1266
      %v1268 = vlaneseq
      %v1269 = vshrl.u32 %v1268, 7
      %v1270 = vsub.s32 %v1267, %v1269
      %v1271 = vrot.slane %v1257, %v1270
      %v1272 = vcombine.low %v1264, %v1271
      %v1274 = vunpack.c.l.s4 1966171168
      %v1275 = vunpack.c.0.s8 %v1274
      %v1276 = vlaneseq
      %v1277 = vshrl.u32 %v1276, 7
      %v1278 = vsub.s32 %v1275, %v1277
      %v1279 = vrot.slane %v1272, %v1278
      %v1281 = vadd.f32 %v1247, %v1279
      %1282 = vst.msk [vmem:[#allocation3] sm:$0xf] %vm430, %v1281
      // Predicated region
      $region61: #{bce_ranking_loss.1} parent=55 // pred_check
        %p1283 = pneg %p403
      $region62: #{bce_ranking_loss.1} parent=55 // pred_check_branch
        %1285 = sbr.rel (%p1283) target = $region64
      $region63: #{bce_ranking_loss.1} parent=55 // pred_region
        %v1286 = vld [vmem:[#allocation3] sm:$0xf]
        %v1288 = vlaneseq
        %v1289 = vshrl.u32 %v1288, 7
        %v1290 = vsub.s32 0, %v1289
        %v1291 = vrot.slane %v1286, %v1290
        %v1292 = vlaneseq
        %v1293 = vshrl.u32 %v1292, 7
        %v1294 = vsub.s32 1, %v1293
        %v1295 = vrot.slane %v1286, %v1294
        %v1296 = vlaneseq
        %v1297 = vshrl.u32 %v1296, 7
        %v1298 = vsub.s32 2, %v1297
        %v1299 = vrot.slane %v1286, %v1298
        %v1300 = vlaneseq
        %v1301 = vshrl.u32 %v1300, 7
        %v1302 = vsub.s32 3, %v1301
        %v1303 = vrot.slane %v1286, %v1302
        %vm1308 = vcmask 1040384
        %v1309 = vsel %vm1308, %v1291, 0.0
        %v1310 = vsel %vm1308, %v1295, 0.0
        %v1311 = vadd.f32 %v1309, %v1310
        %v1312 = vsel %vm1308, %v1299, 0.0
        %v1313 = vadd.f32 %v1311, %v1312
        %v1314 = vsel %vm1308, %v1303, 0.0
        %v1315 = vadd.f32 %v1313, %v1314
        %1316 = vadd.xlane.f32.xlu0 %v1315
        %v1317 = vpop.xlane.xlu0 %1316
        %v1318 = vrot.slane %v1317, 4
        %v1319 = vadd.f32 %v1317, %v1318
        %v1320 = vrot.slane %v1319, 2
        %v1321 = vadd.f32 %v1319, %v1320
        %v1322 = vrot.slane %v1321, 1
        %v1323 = vadd.f32 %v1321, %v1322
        %s1324 = vtos %v1323
        %v1325 = vstv %s1324
        %v1326 = vmul.f32 %v1325, 0.001953125
        %1327 = vst [vmem:[%s402] sm:$0xff] %v1326
      $region64: #{bce_ranking_loss.1} parent=55 // pred_fallthru
        _
      %p1328 = scmp.lt.s32.totalorder %s26, 1
      %s1329 = scalar_select %p1328, %s26, 1
      %s1330 = smul.addr %s1329, 8
      %s1331 = scalar_lea.vmem %s9, %s1330
      // Predicated region
      $region65: #{bce_ranking_loss.1} parent=55 // pred_check
        %p1332 = pneg %p262
      $region66: #{bce_ranking_loss.1} parent=55 // pred_check_branch
        %1334 = sbr.rel (%p1332) target = $region68
      $region67: #{bce_ranking_loss.1} parent=55 // pred_region
        _
      $region68: #{bce_ranking_loss.1} parent=55 // pred_fallthru
        _
    $region56: #{bce_ranking_loss.1} parent=5 // pred_fallthru
      _
    %p1335 = scmp.le.s32.totalorder 2, %s17
    // Predicated region
    $region69: #{bce_ranking_loss.1} parent=5 // pred_check
      %p1336 = pneg %p1335
    $region70: #{bce_ranking_loss.1} parent=5 // pred_check_branch
      %1338 = sbr.rel (%p1336) target = $region72
    $region71: #{bce_ranking_loss.1} parent=5 // pred_region
      %s1339 = ssub.s32 %s17, 2
      // Predicated region
      $region73: #{bce_ranking_loss.1} parent=71 // pred_check
        %p1340 = pneg %p268
      $region74: #{bce_ranking_loss.1} parent=71 // pred_check_branch
        %1342 = sbr.rel (%p1340) target = $region76
      $region75: #{bce_ranking_loss.1} parent=71 // pred_region
        %p1343 = scmp.lt.s32.totalorder %s28, 1
        %s1344 = scalar_select %p1343, %s28, 1
        %s1345 = smul.addr %s1344, 8
        %s1346 = scalar_lea.vmem %s9, %s1345
      $region76: #{bce_ranking_loss.1} parent=71 // pred_fallthru
        _
    $region72: #{bce_ranking_loss.1} parent=5 // pred_fallthru
      _
  $region6: #{bce_ranking_loss.1} parent=0 // loop_footer
    %s21 = sadd.s32 1, %s17
  $region7: #{bce_ranking_loss.1} parent=0 // loop_footer_branch
    %16 = sbr.rel target = $region3
  $region8: #{bce_ranking_loss.1} parent=0 // loop_exit
    _

</llo_original>
